<compile_context>
chip_gen: v7x
topology: tpu7x:2x2x1
jax: 0.10.0
libtpu: 0.0.40
codegen_flags: <defaults>
</compile_context>

<pallas_src>
import functools

import numpy as np

import jax
import jax.numpy as jnp
from jax import lax
from jax.experimental import pallas as pl
from jax.experimental.pallas import tpu as pltpu

_BN_EPS = 1e-5


# ----------------------------- kernel body ---------------------------------


def _conv_pool_bn(act, wmat, bgb, pmat, *, N, K, pad):
    """One block: Conv1d(circular) -> ReLU -> AvgPool1d -> BatchNorm1d.

    act  : (N*L, Cin)      activations (batch*length on sublanes, chans on lanes)
    wmat : (K*Cin, Cout)   conv weight, rows ordered (k, ci)
    bgb  : (3, Cout)       rows = conv bias, BN gamma, BN beta
    pmat : (N*Lp, N*Lout)  constant average-pooling matrix
    returns (N*Lp, Cout)
    """
    NL, Cin = act.shape
    L = NL // N
    Lout = L + 2 * pad - K + 1

    # Circular padding along the per-sample length axis: one slice pair +
    # concat for the WHOLE batch (no per-sample python loop).
    x3 = act.reshape(N, L, Cin)               # layout no-op (L % 8 == 0)
    if pad > 0:
        x3 = jnp.concatenate([x3[:, L - pad:, :], x3, x3[:, :pad, :]], axis=1)

    # im2col: K shifted windows stacked on the lane axis -> ONE MXU matmul.
    col = jnp.concatenate([x3[:, k:k + Lout, :] for k in range(K)], axis=2)
    col = col.reshape(N * Lout, K * Cin)      # layout no-op (Lout % 8 == 0)

    y = jnp.dot(col, wmat, preferred_element_type=jnp.float32) + bgb[0:1, :]
    y = jnp.maximum(y, 0.0)                                        # ReLU
    pooled = jnp.dot(pmat, y, preferred_element_type=jnp.float32)  # AvgPool1d

    # BatchNorm1d, training-mode batch stats (biased variance, eps=1e-5),
    # computed on local values (no ref round-trip).
    mean = jnp.mean(pooled, axis=0, keepdims=True)
    var = jnp.mean((pooled - mean) ** 2, axis=0, keepdims=True)
    return ((pooled - mean) * lax.rsqrt(var + _BN_EPS) * bgb[1:2, :]
            + bgb[2:3, :])


def _encoder_kernel(x_ref,
                    cw1, bgb1, pm1,
                    cw2, bgb2, pm2,
                    cw3, bgb3, pm3,
                    hw1, hw2, hw3, hb,
                    o_ref, *, N, K, pad):
    act = x_ref[...]                                             # (N*L, Cin)
    for cw, bgb, pm in ((cw1, bgb1, pm1),
                        (cw2, bgb2, pm2),
                        (cw3, bgb3, pm3)):
        act = _conv_pool_bn(act, cw[...], bgb[...], pm[...], N=N, K=K, pad=pad)

    # Flatten (matches x.view(N, -1) on (N, C, Lp)): gather each sample's rows
    # into an (N, Lp*C) slab with (l, c)-ordered columns; hw1 rows were
    # permuted into the same order at pack time, so layer 1 is a single matmul
    # serving BOTH heads (mu | logsigma fused along the output axis).
    Lp = act.shape[0] // N
    cols = []
    for l in range(Lp):
        cols.append(jnp.concatenate(
            [act[n * Lp + l:n * Lp + l + 1, :] for n in range(N)], axis=0))
    hflat = jnp.concatenate(cols, axis=1)                        # (N, Lp*C)

    hb_v = hb[...]                                               # (3, 2*100)
    h = jnp.dot(hflat, hw1[...], preferred_element_type=jnp.float32)
    h = jnp.maximum(h + hb_v[0:1, :hw1.shape[1]], 0.0)
    h = jnp.dot(h, hw2[...], preferred_element_type=jnp.float32)
    h = jnp.maximum(h + hb_v[1:2, :hw2.shape[1]], 0.0)
    o = jnp.dot(h, hw3[...], preferred_element_type=jnp.float32)
    o_ref[...] = (o + hb_v[2:3, :hw3.shape[1]]).astype(o_ref.dtype)


# ----------------------------- wrappers -------------------------------------


def encode_forward(x, packed, *, kernel_size, pad, latent):
    N, Cin, L = x.shape
    # Layout plumbing only: (N, C, L) -> (N*L, C), one tiny XLA transpose.
    xk = jnp.transpose(x, (0, 2, 1)).reshape(N * L, Cin)
    vspec = pl.BlockSpec(memory_space=pltpu.MemorySpace.VMEM)
    out = pl.pallas_call(
        functools.partial(_encoder_kernel, N=N, K=kernel_size, pad=pad),
        out_shape=jax.ShapeDtypeStruct((N, 2 * latent), jnp.float32),
        in_specs=[vspec] * (1 + len(packed)),
        out_specs=vspec,
    )(xk, *packed)
    return out[:, :latent], out[:, latent:]


def _pool_matrix(n_batch, lout, pool):
    lp = lout // pool
    q = np.arange(n_batch * lp)[:, None]
    m = np.arange(n_batch * lout)[None, :]
    same_sample = (m // lout) == (q // lp)
    same_window = ((m % lout) // pool) == (q % lp)
    in_range = (m % lout) < lp * pool
    return jnp.asarray(
        (same_sample & same_window & in_range).astype(np.float32) / pool)


def _block_diag(a, b):
    ra, ca = a.shape
    rb, cb = b.shape
    top = jnp.concatenate([a, jnp.zeros((ra, cb), a.dtype)], axis=1)
    bot = jnp.concatenate([jnp.zeros((rb, ca), b.dtype), b], axis=1)
    return jnp.concatenate([top, bot], axis=0)


def pack_params(p, *, n_batch, input_size, kernel_size, pad, pool, hidden):
    """One-time (outside jit) repack of logical params into kernel layouts."""
    K = kernel_size
    packed = []
    L = input_size
    for i in range(1, 4):
        w = p[f"w{i}"]                                  # (Cout, Cin, K) torch layout
        co, ci, _ = w.shape
        wmat = jnp.transpose(w, (2, 1, 0)).reshape(K * ci, co)   # rows (k, ci)
        lout = L + 2 * pad - K + 1
        pm = _pool_matrix(n_batch, lout, pool)
        bgb = jnp.stack([p[f"b{i}"], p[f"g{i}"], p[f"bt{i}"]], axis=0)  # (3, co)
        packed += [wmat, bgb, pm]
        L = lout // pool
    # Heads: fuse mu & logsigma; permute layer-1 rows (torch flatten order
    # c*Lp + l) into the kernel's (l, c) column order.
    c3, lp3 = 4 * hidden, L
    w1 = jnp.concatenate([p["mu_w1"], p["ls_w1"]], axis=1)       # (feat, 200)
    w1 = w1.reshape(c3, lp3, -1).transpose(1, 0, 2).reshape(c3 * lp3, -1)
    w2 = _block_diag(p["mu_w2"], p["ls_w2"])                     # (200, 100)
    w3 = _block_diag(p["mu_w3"], p["ls_w3"])                     # (100, 2*latent)
    b1 = jnp.concatenate([p["mu_b1"], p["ls_b1"]])
    b2 = jnp.concatenate([p["mu_b2"], p["ls_b2"]])
    b3 = jnp.concatenate([p["mu_b3"], p["ls_b3"]])
    width = b1.shape[0]
    hb = jnp.concatenate(
        [jnp.pad(b, (0, width - b.shape[0]))[None, :] for b in (b1, b2, b3)],
        axis=0)                                                  # (3, 200)
    packed += [w1, w2, w3, hb]
    return tuple(packed)


def init_params(key, c_in, hidden, k_size, latent, feat):
    ks = iter(jax.random.split(key, 18))

    def rnd(k, fan_in, shape):
        return (jax.random.normal(k, shape, jnp.float32)
                / jnp.sqrt(jnp.float32(fan_in)))

    p = {}
    chans = [(c_in, hidden), (hidden, 2 * hidden), (2 * hidden, 4 * hidden)]
    for i, (ci, co) in enumerate(chans, 1):
        p[f"w{i}"] = rnd(next(ks), ci * k_size, (co, ci, k_size))  # torch Conv1d layout
        p[f"b{i}"] = rnd(next(ks), ci * k_size, (co,))
        p[f"g{i}"] = jnp.ones((co,), jnp.float32)    # BatchNorm weight init
        p[f"bt{i}"] = jnp.zeros((co,), jnp.float32)  # BatchNorm bias init
    for head in ("mu", "ls"):
        p[f"{head}_w1"] = rnd(next(ks), feat, (feat, 100))
        p[f"{head}_b1"] = rnd(next(ks), feat, (100,))
        p[f"{head}_w2"] = rnd(next(ks), 100, (100, 50))
        p[f"{head}_b2"] = rnd(next(ks), 100, (50,))
        p[f"{head}_w3"] = rnd(next(ks), 50, (50, latent))
        p[f"{head}_b3"] = rnd(next(ks), 50, (latent,))
    return p


# ----------------------------- pure-JAX reference ---------------------------


def _ref_circular_conv1d(x, w, b, pad):
    """x: (N, Cin, L); w: (Cout, Cin, K) -> (N, Cout, Lout)."""
    K = w.shape[2]
    L = x.shape[2]
    xp = jnp.concatenate([x[:, :, L - pad:], x, x[:, :, :pad]], axis=2)
    Lout = L + 2 * pad - K + 1
    taps = jnp.stack([xp[:, :, k:k + Lout] for k in range(K)], axis=0)
    return jnp.einsum("knil,oik->nol", taps, w) + b[None, :, None]


def encode_reference(x, p, *, pad, pool):
    N = x.shape[0]
    act = x
    for i in range(1, 4):
        y = jnp.maximum(_ref_circular_conv1d(act, p[f"w{i}"], p[f"b{i}"], pad), 0.0)
        C, Lout = y.shape[1], y.shape[2]
        lp = Lout // pool
        y = y[:, :, :lp * pool].reshape(N, C, lp, pool).mean(axis=3)
        mean = y.mean(axis=(0, 2), keepdims=True)
        var = ((y - mean) ** 2).mean(axis=(0, 2), keepdims=True)
        act = ((y - mean) * lax.rsqrt(var + _BN_EPS)
               * p[f"g{i}"][None, :, None] + p[f"bt{i}"][None, :, None])
    flat = act.reshape(N, -1)

    def head(prefix):
        h = jnp.maximum(flat @ p[f"{prefix}_w1"] + p[f"{prefix}_b1"], 0.0)
        h = jnp.maximum(h @ p[f"{prefix}_w2"] + p[f"{prefix}_b2"], 0.0)
        return h @ p[f"{prefix}_w3"] + p[f"{prefix}_b3"]

    return head("mu"), head("ls")


if __name__ == "__main__":
    # Module hyper-params: input_channels=4, input_size=64, hidden_channels=8,
    # latent_dimension=16, padding=1, kernel_size=3, pooling_size=2,
    # activation=ReLU, padding_mode='circular'.
    N, C_IN, L = 2, 4, 64
    HIDDEN, LATENT = 8, 16
    K_SIZE, PAD, POOL = 3, 1, 2
    FEAT = 4 * HIDDEN * (L // POOL ** 3)   # flattened feature size after 3 blocks

    key = jax.random.PRNGKey(0)
    kx, kp = jax.random.split(key)
    x = jax.random.normal(kx, (N, C_IN, L), jnp.float32)
    params = init_params(kp, C_IN, HIDDEN, K_SIZE, LATENT, FEAT)
    packed = pack_params(params, n_batch=N, input_size=L, kernel_size=K_SIZE,
                         pad=PAD, pool=POOL, hidden=HIDDEN)

    fwd = jax.jit(functools.partial(encode_forward, kernel_size=K_SIZE,
                                    pad=PAD, latent=LATENT))
    mu, logstd = fwd(x, packed)
    jax.block_until_ready((mu, logstd))

    assert mu.shape == (N, LATENT) and logstd.shape == (N, LATENT)
    assert bool(jnp.all(jnp.isfinite(mu))) and bool(jnp.all(jnp.isfinite(logstd)))

    # Correctness check against a pure-JAX reference (loose tol: MXU f32
    # matmul passes vs XLA einsum/conv accumulation order differ slightly).
    mu_ref, ls_ref = encode_reference(x, params, pad=PAD, pool=POOL)
    assert bool(jnp.allclose(mu, mu_ref, rtol=2e-2, atol=2e-2))
    assert bool(jnp.allclose(logstd, ls_ref, rtol=2e-2, atol=2e-2))

    print("KERNEL_OK")
</pallas_src>

<mosaic_0001>
module attributes {stable_mosaic.version = 11 : i64} {
  func.func @_encoder_kernel(%arg0: memref<128x4xf32, #tpu.memory_space<vmem>>, %arg1: memref<12x8xf32, #tpu.memory_space<vmem>>, %arg2: memref<3x8xf32, #tpu.memory_space<vmem>>, %arg3: memref<64x128xf32, #tpu.memory_space<vmem>>, %arg4: memref<24x16xf32, #tpu.memory_space<vmem>>, %arg5: memref<3x16xf32, #tpu.memory_space<vmem>>, %arg6: memref<32x64xf32, #tpu.memory_space<vmem>>, %arg7: memref<48x32xf32, #tpu.memory_space<vmem>>, %arg8: memref<3x32xf32, #tpu.memory_space<vmem>>, %arg9: memref<16x32xf32, #tpu.memory_space<vmem>>, %arg10: memref<256x200xf32, #tpu.memory_space<vmem>>, %arg11: memref<200x100xf32, #tpu.memory_space<vmem>>, %arg12: memref<100x32xf32, #tpu.memory_space<vmem>>, %arg13: memref<3x200xf32, #tpu.memory_space<vmem>>, %arg14: memref<2x32xf32, #tpu.memory_space<vmem>>) attributes {dimension_semantics = [], scalar_prefetch = 0 : i64, scratch_operands = 0 : i64, tpu.core_type = #tpu.core_type<tc>} {
    %c0 = arith.constant 0 : index
    %c0_0 = arith.constant 0 : index
    %0 = vector.load %arg0[%c0, %c0_0] : memref<128x4xf32, #tpu.memory_space<vmem>>, vector<128x4xf32>
    %c0_1 = arith.constant 0 : index
    %c0_2 = arith.constant 0 : index
    %1 = vector.load %arg1[%c0_1, %c0_2] : memref<12x8xf32, #tpu.memory_space<vmem>>, vector<12x8xf32>
    %c0_3 = arith.constant 0 : index
    %c0_4 = arith.constant 0 : index
    %2 = vector.load %arg2[%c0_3, %c0_4] : memref<3x8xf32, #tpu.memory_space<vmem>>, vector<3x8xf32>
    %c0_5 = arith.constant 0 : index
    %c0_6 = arith.constant 0 : index
    %3 = vector.load %arg3[%c0_5, %c0_6] : memref<64x128xf32, #tpu.memory_space<vmem>>, vector<64x128xf32>
    %4 = vector.shape_cast %0 : vector<128x4xf32> to vector<2x64x4xf32>
    %5 = vector.extract_strided_slice %4 {offsets = [0, 63, 0], sizes = [2, 1, 4], strides = [1, 1, 1]} : vector<2x64x4xf32> to vector<2x1x4xf32>
    %6 = vector.extract_strided_slice %4 {offsets = [0, 0, 0], sizes = [2, 1, 4], strides = [1, 1, 1]} : vector<2x64x4xf32> to vector<2x1x4xf32>
    %7 = tpu.concatenate %5, %4, %6 in 1 : vector<2x1x4xf32>, vector<2x64x4xf32>, vector<2x1x4xf32> -> vector<2x66x4xf32>
    %8 = vector.extract_strided_slice %7 {offsets = [0, 0, 0], sizes = [2, 64, 4], strides = [1, 1, 1]} : vector<2x66x4xf32> to vector<2x64x4xf32>
    %9 = vector.extract_strided_slice %7 {offsets = [0, 1, 0], sizes = [2, 64, 4], strides = [1, 1, 1]} : vector<2x66x4xf32> to vector<2x64x4xf32>
    %10 = vector.extract_strided_slice %7 {offsets = [0, 2, 0], sizes = [2, 64, 4], strides = [1, 1, 1]} : vector<2x66x4xf32> to vector<2x64x4xf32>
    %11 = tpu.concatenate %8, %9, %10 in 2 : vector<2x64x4xf32>, vector<2x64x4xf32>, vector<2x64x4xf32> -> vector<2x64x12xf32>
    %12 = vector.shape_cast %11 : vector<2x64x12xf32> to vector<128x12xf32>
    %cst = arith.constant dense<0.000000e+00> : vector<128x8xf32>
    %13 = tpu.matmul %12, %1, %cst {dimension_numbers = #tpu.dot_dimension_numbers<[1], [0], [0], [1], [0, 0, 1, 1], [], []>} : vector<128x12xf32>, vector<12x8xf32>, vector<128x8xf32> -> vector<128x8xf32>
    %14 = vector.extract_strided_slice %2 {offsets = [0, 0], sizes = [1, 8], strides = [1, 1]} : vector<3x8xf32> to vector<1x8xf32>
    %15 = vector.broadcast %14 : vector<1x8xf32> to vector<128x8xf32>
    %16 = arith.addf %13, %15 : vector<128x8xf32>
    %cst_7 = arith.constant 0.000000e+00 : f32
    %17 = vector.broadcast %cst_7 : f32 to vector<128x8xf32>
    %18 = arith.maximumf %16, %17 : vector<128x8xf32>
    %cst_8 = arith.constant dense<0.000000e+00> : vector<64x8xf32>
    %19 = tpu.matmul %3, %18, %cst_8 {dimension_numbers = #tpu.dot_dimension_numbers<[1], [0], [0], [1], [0, 0, 1, 1], [], []>} : vector<64x128xf32>, vector<128x8xf32>, vector<64x8xf32> -> vector<64x8xf32>
    %cst_9 = arith.constant dense<0.000000e+00> : vector<8xf32>
    %20 = vector.multi_reduction <add>, %19, %cst_9 [0] : vector<64x8xf32> to vector<8xf32>
    %21 = vector.shape_cast %20 : vector<8xf32> to vector<1x8xf32>
    %cst_10 = arith.constant 6.400000e+01 : f32
    %22 = vector.broadcast %cst_10 : f32 to vector<1x8xf32>
    %23 = arith.divf %21, %22 : vector<1x8xf32>
    %24 = vector.broadcast %23 : vector<1x8xf32> to vector<64x8xf32>
    %25 = arith.subf %19, %24 : vector<64x8xf32>
    %26 = arith.mulf %25, %25 : vector<64x8xf32>
    %cst_11 = arith.constant dense<0.000000e+00> : vector<8xf32>
    %27 = vector.multi_reduction <add>, %26, %cst_11 [0] : vector<64x8xf32> to vector<8xf32>
    %28 = vector.shape_cast %27 : vector<8xf32> to vector<1x8xf32>
    %cst_12 = arith.constant 6.400000e+01 : f32
    %29 = vector.broadcast %cst_12 : f32 to vector<1x8xf32>
    %30 = arith.divf %28, %29 : vector<1x8xf32>
    %31 = vector.broadcast %23 : vector<1x8xf32> to vector<64x8xf32>
    %32 = arith.subf %19, %31 : vector<64x8xf32>
    %cst_13 = arith.constant 9.99999974E-6 : f32
    %33 = vector.broadcast %cst_13 : f32 to vector<1x8xf32>
    %34 = arith.addf %30, %33 : vector<1x8xf32>
    %35 = math.rsqrt %34 : vector<1x8xf32>
    %36 = vector.broadcast %35 : vector<1x8xf32> to vector<64x8xf32>
    %37 = arith.mulf %32, %36 : vector<64x8xf32>
    %38 = vector.extract_strided_slice %2 {offsets = [1, 0], sizes = [1, 8], strides = [1, 1]} : vector<3x8xf32> to vector<1x8xf32>
    %39 = vector.broadcast %38 : vector<1x8xf32> to vector<64x8xf32>
    %40 = arith.mulf %37, %39 : vector<64x8xf32>
    %41 = vector.extract_strided_slice %2 {offsets = [2, 0], sizes = [1, 8], strides = [1, 1]} : vector<3x8xf32> to vector<1x8xf32>
    %42 = vector.broadcast %41 : vector<1x8xf32> to vector<64x8xf32>
    %43 = arith.addf %40, %42 : vector<64x8xf32>
    %c0_14 = arith.constant 0 : index
    %c0_15 = arith.constant 0 : index
    %44 = vector.load %arg4[%c0_14, %c0_15] : memref<24x16xf32, #tpu.memory_space<vmem>>, vector<24x16xf32>
    %c0_16 = arith.constant 0 : index
    %c0_17 = arith.constant 0 : index
    %45 = vector.load %arg5[%c0_16, %c0_17] : memref<3x16xf32, #tpu.memory_space<vmem>>, vector<3x16xf32>
    %c0_18 = arith.constant 0 : index
    %c0_19 = arith.constant 0 : index
    %46 = vector.load %arg6[%c0_18, %c0_19] : memref<32x64xf32, #tpu.memory_space<vmem>>, vector<32x64xf32>
    %47 = vector.shape_cast %43 : vector<64x8xf32> to vector<2x32x8xf32>
    %48 = vector.extract_strided_slice %47 {offsets = [0, 31, 0], sizes = [2, 1, 8], strides = [1, 1, 1]} : vector<2x32x8xf32> to vector<2x1x8xf32>
    %49 = vector.extract_strided_slice %47 {offsets = [0, 0, 0], sizes = [2, 1, 8], strides = [1, 1, 1]} : vector<2x32x8xf32> to vector<2x1x8xf32>
    %50 = tpu.concatenate %48, %47, %49 in 1 : vector<2x1x8xf32>, vector<2x32x8xf32>, vector<2x1x8xf32> -> vector<2x34x8xf32>
    %51 = vector.extract_strided_slice %50 {offsets = [0, 0, 0], sizes = [2, 32, 8], strides = [1, 1, 1]} : vector<2x34x8xf32> to vector<2x32x8xf32>
    %52 = vector.extract_strided_slice %50 {offsets = [0, 1, 0], sizes = [2, 32, 8], strides = [1, 1, 1]} : vector<2x34x8xf32> to vector<2x32x8xf32>
    %53 = vector.extract_strided_slice %50 {offsets = [0, 2, 0], sizes = [2, 32, 8], strides = [1, 1, 1]} : vector<2x34x8xf32> to vector<2x32x8xf32>
    %54 = tpu.concatenate %51, %52, %53 in 2 : vector<2x32x8xf32>, vector<2x32x8xf32>, vector<2x32x8xf32> -> vector<2x32x24xf32>
    %55 = vector.shape_cast %54 : vector<2x32x24xf32> to vector<64x24xf32>
    %cst_20 = arith.constant dense<0.000000e+00> : vector<64x16xf32>
    %56 = tpu.matmul %55, %44, %cst_20 {dimension_numbers = #tpu.dot_dimension_numbers<[1], [0], [0], [1], [0, 0, 1, 1], [], []>} : vector<64x24xf32>, vector<24x16xf32>, vector<64x16xf32> -> vector<64x16xf32>
    %57 = vector.extract_strided_slice %45 {offsets = [0, 0], sizes = [1, 16], strides = [1, 1]} : vector<3x16xf32> to vector<1x16xf32>
    %58 = vector.broadcast %57 : vector<1x16xf32> to vector<64x16xf32>
    %59 = arith.addf %56, %58 : vector<64x16xf32>
    %cst_21 = arith.constant 0.000000e+00 : f32
    %60 = vector.broadcast %cst_21 : f32 to vector<64x16xf32>
    %61 = arith.maximumf %59, %60 : vector<64x16xf32>
    %cst_22 = arith.constant dense<0.000000e+00> : vector<32x16xf32>
    %62 = tpu.matmul %46, %61, %cst_22 {dimension_numbers = #tpu.dot_dimension_numbers<[1], [0], [0], [1], [0, 0, 1, 1], [], []>} : vector<32x64xf32>, vector<64x16xf32>, vector<32x16xf32> -> vector<32x16xf32>
    %cst_23 = arith.constant dense<0.000000e+00> : vector<16xf32>
    %63 = vector.multi_reduction <add>, %62, %cst_23 [0] : vector<32x16xf32> to vector<16xf32>
    %64 = vector.shape_cast %63 : vector<16xf32> to vector<1x16xf32>
    %cst_24 = arith.constant 3.200000e+01 : f32
    %65 = vector.broadcast %cst_24 : f32 to vector<1x16xf32>
    %66 = arith.divf %64, %65 : vector<1x16xf32>
    %67 = vector.broadcast %66 : vector<1x16xf32> to vector<32x16xf32>
    %68 = arith.subf %62, %67 : vector<32x16xf32>
    %69 = arith.mulf %68, %68 : vector<32x16xf32>
    %cst_25 = arith.constant dense<0.000000e+00> : vector<16xf32>
    %70 = vector.multi_reduction <add>, %69, %cst_25 [0] : vector<32x16xf32> to vector<16xf32>
    %71 = vector.shape_cast %70 : vector<16xf32> to vector<1x16xf32>
    %cst_26 = arith.constant 3.200000e+01 : f32
    %72 = vector.broadcast %cst_26 : f32 to vector<1x16xf32>
    %73 = arith.divf %71, %72 : vector<1x16xf32>
    %74 = vector.broadcast %66 : vector<1x16xf32> to vector<32x16xf32>
    %75 = arith.subf %62, %74 : vector<32x16xf32>
    %cst_27 = arith.constant 9.99999974E-6 : f32
    %76 = vector.broadcast %cst_27 : f32 to vector<1x16xf32>
    %77 = arith.addf %73, %76 : vector<1x16xf32>
    %78 = math.rsqrt %77 : vector<1x16xf32>
    %79 = vector.broadcast %78 : vector<1x16xf32> to vector<32x16xf32>
    %80 = arith.mulf %75, %79 : vector<32x16xf32>
    %81 = vector.extract_strided_slice %45 {offsets = [1, 0], sizes = [1, 16], strides = [1, 1]} : vector<3x16xf32> to vector<1x16xf32>
    %82 = vector.broadcast %81 : vector<1x16xf32> to vector<32x16xf32>
    %83 = arith.mulf %80, %82 : vector<32x16xf32>
    %84 = vector.extract_strided_slice %45 {offsets = [2, 0], sizes = [1, 16], strides = [1, 1]} : vector<3x16xf32> to vector<1x16xf32>
    %85 = vector.broadcast %84 : vector<1x16xf32> to vector<32x16xf32>
    %86 = arith.addf %83, %85 : vector<32x16xf32>
    %c0_28 = arith.constant 0 : index
    %c0_29 = arith.constant 0 : index
    %87 = vector.load %arg7[%c0_28, %c0_29] : memref<48x32xf32, #tpu.memory_space<vmem>>, vector<48x32xf32>
    %c0_30 = arith.constant 0 : index
    %c0_31 = arith.constant 0 : index
    %88 = vector.load %arg8[%c0_30, %c0_31] : memref<3x32xf32, #tpu.memory_space<vmem>>, vector<3x32xf32>
    %c0_32 = arith.constant 0 : index
    %c0_33 = arith.constant 0 : index
    %89 = vector.load %arg9[%c0_32, %c0_33] : memref<16x32xf32, #tpu.memory_space<vmem>>, vector<16x32xf32>
    %90 = vector.shape_cast %86 : vector<32x16xf32> to vector<2x16x16xf32>
    %91 = vector.extract_strided_slice %90 {offsets = [0, 15, 0], sizes = [2, 1, 16], strides = [1, 1, 1]} : vector<2x16x16xf32> to vector<2x1x16xf32>
    %92 = vector.extract_strided_slice %90 {offsets = [0, 0, 0], sizes = [2, 1, 16], strides = [1, 1, 1]} : vector<2x16x16xf32> to vector<2x1x16xf32>
    %93 = tpu.concatenate %91, %90, %92 in 1 : vector<2x1x16xf32>, vector<2x16x16xf32>, vector<2x1x16xf32> -> vector<2x18x16xf32>
    %94 = vector.extract_strided_slice %93 {offsets = [0, 0, 0], sizes = [2, 16, 16], strides = [1, 1, 1]} : vector<2x18x16xf32> to vector<2x16x16xf32>
    %95 = vector.extract_strided_slice %93 {offsets = [0, 1, 0], sizes = [2, 16, 16], strides = [1, 1, 1]} : vector<2x18x16xf32> to vector<2x16x16xf32>
    %96 = vector.extract_strided_slice %93 {offsets = [0, 2, 0], sizes = [2, 16, 16], strides = [1, 1, 1]} : vector<2x18x16xf32> to vector<2x16x16xf32>
    %97 = tpu.concatenate %94, %95, %96 in 2 : vector<2x16x16xf32>, vector<2x16x16xf32>, vector<2x16x16xf32> -> vector<2x16x48xf32>
    %98 = vector.shape_cast %97 : vector<2x16x48xf32> to vector<32x48xf32>
    %cst_34 = arith.constant dense<0.000000e+00> : vector<32x32xf32>
    %99 = tpu.matmul %98, %87, %cst_34 {dimension_numbers = #tpu.dot_dimension_numbers<[1], [0], [0], [1], [0, 0, 1, 1], [], []>} : vector<32x48xf32>, vector<48x32xf32>, vector<32x32xf32> -> vector<32x32xf32>
    %100 = vector.extract_strided_slice %88 {offsets = [0, 0], sizes = [1, 32], strides = [1, 1]} : vector<3x32xf32> to vector<1x32xf32>
    %101 = vector.broadcast %100 : vector<1x32xf32> to vector<32x32xf32>
    %102 = arith.addf %99, %101 : vector<32x32xf32>
    %cst_35 = arith.constant 0.000000e+00 : f32
    %103 = vector.broadcast %cst_35 : f32 to vector<32x32xf32>
    %104 = arith.maximumf %102, %103 : vector<32x32xf32>
    %cst_36 = arith.constant dense<0.000000e+00> : vector<16x32xf32>
    %105 = tpu.matmul %89, %104, %cst_36 {dimension_numbers = #tpu.dot_dimension_numbers<[1], [0], [0], [1], [0, 0, 1, 1], [], []>} : vector<16x32xf32>, vector<32x32xf32>, vector<16x32xf32> -> vector<16x32xf32>
    %cst_37 = arith.constant dense<0.000000e+00> : vector<32xf32>
    %106 = vector.multi_reduction <add>, %105, %cst_37 [0] : vector<16x32xf32> to vector<32xf32>
    %107 = vector.shape_cast %106 : vector<32xf32> to vector<1x32xf32>
    %cst_38 = arith.constant 1.600000e+01 : f32
    %108 = vector.broadcast %cst_38 : f32 to vector<1x32xf32>
    %109 = arith.divf %107, %108 : vector<1x32xf32>
    %110 = vector.broadcast %109 : vector<1x32xf32> to vector<16x32xf32>
    %111 = arith.subf %105, %110 : vector<16x32xf32>
    %112 = arith.mulf %111, %111 : vector<16x32xf32>
    %cst_39 = arith.constant dense<0.000000e+00> : vector<32xf32>
    %113 = vector.multi_reduction <add>, %112, %cst_39 [0] : vector<16x32xf32> to vector<32xf32>
    %114 = vector.shape_cast %113 : vector<32xf32> to vector<1x32xf32>
    %cst_40 = arith.constant 1.600000e+01 : f32
    %115 = vector.broadcast %cst_40 : f32 to vector<1x32xf32>
    %116 = arith.divf %114, %115 : vector<1x32xf32>
    %117 = vector.broadcast %109 : vector<1x32xf32> to vector<16x32xf32>
    %118 = arith.subf %105, %117 : vector<16x32xf32>
    %cst_41 = arith.constant 9.99999974E-6 : f32
    %119 = vector.broadcast %cst_41 : f32 to vector<1x32xf32>
    %120 = arith.addf %116, %119 : vector<1x32xf32>
    %121 = math.rsqrt %120 : vector<1x32xf32>
    %122 = vector.broadcast %121 : vector<1x32xf32> to vector<16x32xf32>
    %123 = arith.mulf %118, %122 : vector<16x32xf32>
    %124 = vector.extract_strided_slice %88 {offsets = [1, 0], sizes = [1, 32], strides = [1, 1]} : vector<3x32xf32> to vector<1x32xf32>
    %125 = vector.broadcast %124 : vector<1x32xf32> to vector<16x32xf32>
    %126 = arith.mulf %123, %125 : vector<16x32xf32>
    %127 = vector.extract_strided_slice %88 {offsets = [2, 0], sizes = [1, 32], strides = [1, 1]} : vector<3x32xf32> to vector<1x32xf32>
    %128 = vector.broadcast %127 : vector<1x32xf32> to vector<16x32xf32>
    %129 = arith.addf %126, %128 : vector<16x32xf32>
    %130 = vector.extract_strided_slice %129 {offsets = [0, 0], sizes = [1, 32], strides = [1, 1]} : vector<16x32xf32> to vector<1x32xf32>
    %131 = vector.extract_strided_slice %129 {offsets = [8, 0], sizes = [1, 32], strides = [1, 1]} : vector<16x32xf32> to vector<1x32xf32>
    %132 = tpu.concatenate %130, %131 in 0 : vector<1x32xf32>, vector<1x32xf32> -> vector<2x32xf32>
    %133 = vector.extract_strided_slice %129 {offsets = [1, 0], sizes = [1, 32], strides = [1, 1]} : vector<16x32xf32> to vector<1x32xf32>
    %134 = vector.extract_strided_slice %129 {offsets = [9, 0], sizes = [1, 32], strides = [1, 1]} : vector<16x32xf32> to vector<1x32xf32>
    %135 = tpu.concatenate %133, %134 in 0 : vector<1x32xf32>, vector<1x32xf32> -> vector<2x32xf32>
    %136 = vector.extract_strided_slice %129 {offsets = [2, 0], sizes = [1, 32], strides = [1, 1]} : vector<16x32xf32> to vector<1x32xf32>
    %137 = vector.extract_strided_slice %129 {offsets = [10, 0], sizes = [1, 32], strides = [1, 1]} : vector<16x32xf32> to vector<1x32xf32>
    %138 = tpu.concatenate %136, %137 in 0 : vector<1x32xf32>, vector<1x32xf32> -> vector<2x32xf32>
    %139 = vector.extract_strided_slice %129 {offsets = [3, 0], sizes = [1, 32], strides = [1, 1]} : vector<16x32xf32> to vector<1x32xf32>
    %140 = vector.extract_strided_slice %129 {offsets = [11, 0], sizes = [1, 32], strides = [1, 1]} : vector<16x32xf32> to vector<1x32xf32>
    %141 = tpu.concatenate %139, %140 in 0 : vector<1x32xf32>, vector<1x32xf32> -> vector<2x32xf32>
    %142 = vector.extract_strided_slice %129 {offsets = [4, 0], sizes = [1, 32], strides = [1, 1]} : vector<16x32xf32> to vector<1x32xf32>
    %143 = vector.extract_strided_slice %129 {offsets = [12, 0], sizes = [1, 32], strides = [1, 1]} : vector<16x32xf32> to vector<1x32xf32>
    %144 = tpu.concatenate %142, %143 in 0 : vector<1x32xf32>, vector<1x32xf32> -> vector<2x32xf32>
    %145 = vector.extract_strided_slice %129 {offsets = [5, 0], sizes = [1, 32], strides = [1, 1]} : vector<16x32xf32> to vector<1x32xf32>
    %146 = vector.extract_strided_slice %129 {offsets = [13, 0], sizes = [1, 32], strides = [1, 1]} : vector<16x32xf32> to vector<1x32xf32>
    %147 = tpu.concatenate %145, %146 in 0 : vector<1x32xf32>, vector<1x32xf32> -> vector<2x32xf32>
    %148 = vector.extract_strided_slice %129 {offsets = [6, 0], sizes = [1, 32], strides = [1, 1]} : vector<16x32xf32> to vector<1x32xf32>
    %149 = vector.extract_strided_slice %129 {offsets = [14, 0], sizes = [1, 32], strides = [1, 1]} : vector<16x32xf32> to vector<1x32xf32>
    %150 = tpu.concatenate %148, %149 in 0 : vector<1x32xf32>, vector<1x32xf32> -> vector<2x32xf32>
    %151 = vector.extract_strided_slice %129 {offsets = [7, 0], sizes = [1, 32], strides = [1, 1]} : vector<16x32xf32> to vector<1x32xf32>
    %152 = vector.extract_strided_slice %129 {offsets = [15, 0], sizes = [1, 32], strides = [1, 1]} : vector<16x32xf32> to vector<1x32xf32>
    %153 = tpu.concatenate %151, %152 in 0 : vector<1x32xf32>, vector<1x32xf32> -> vector<2x32xf32>
    %154 = tpu.concatenate %132, %135, %138, %141, %144, %147, %150, %153 in 1 : vector<2x32xf32>, vector<2x32xf32>, vector<2x32xf32>, vector<2x32xf32>, vector<2x32xf32>, vector<2x32xf32>, vector<2x32xf32>, vector<2x32xf32> -> vector<2x256xf32>
    %c0_42 = arith.constant 0 : index
    %c0_43 = arith.constant 0 : index
    %155 = vector.load %arg13[%c0_42, %c0_43] : memref<3x200xf32, #tpu.memory_space<vmem>>, vector<3x200xf32>
    %c0_44 = arith.constant 0 : index
    %c0_45 = arith.constant 0 : index
    %156 = vector.load %arg10[%c0_44, %c0_45] : memref<256x200xf32, #tpu.memory_space<vmem>>, vector<256x200xf32>
    %cst_46 = arith.constant dense<0.000000e+00> : vector<2x200xf32>
    %157 = tpu.matmul %154, %156, %cst_46 {dimension_numbers = #tpu.dot_dimension_numbers<[1], [0], [0], [1], [0, 0, 1, 1], [], []>} : vector<2x256xf32>, vector<256x200xf32>, vector<2x200xf32> -> vector<2x200xf32>
    %158 = vector.extract_strided_slice %155 {offsets = [0, 0], sizes = [1, 200], strides = [1, 1]} : vector<3x200xf32> to vector<1x200xf32>
    %159 = vector.broadcast %158 : vector<1x200xf32> to vector<2x200xf32>
    %160 = arith.addf %157, %159 : vector<2x200xf32>
    %cst_47 = arith.constant 0.000000e+00 : f32
    %161 = vector.broadcast %cst_47 : f32 to vector<2x200xf32>
    %162 = arith.maximumf %160, %161 : vector<2x200xf32>
    %c0_48 = arith.constant 0 : index
    %c0_49 = arith.constant 0 : index
    %163 = vector.load %arg11[%c0_48, %c0_49] : memref<200x100xf32, #tpu.memory_space<vmem>>, vector<200x100xf32>
    %cst_50 = arith.constant dense<0.000000e+00> : vector<2x100xf32>
    %164 = tpu.matmul %162, %163, %cst_50 {dimension_numbers = #tpu.dot_dimension_numbers<[1], [0], [0], [1], [0, 0, 1, 1], [], []>} : vector<2x200xf32>, vector<200x100xf32>, vector<2x100xf32> -> vector<2x100xf32>
    %165 = vector.extract_strided_slice %155 {offsets = [1, 0], sizes = [1, 100], strides = [1, 1]} : vector<3x200xf32> to vector<1x100xf32>
    %166 = vector.broadcast %165 : vector<1x100xf32> to vector<2x100xf32>
    %167 = arith.addf %164, %166 : vector<2x100xf32>
    %cst_51 = arith.constant 0.000000e+00 : f32
    %168 = vector.broadcast %cst_51 : f32 to vector<2x100xf32>
    %169 = arith.maximumf %167, %168 : vector<2x100xf32>
    %c0_52 = arith.constant 0 : index
    %c0_53 = arith.constant 0 : index
    %170 = vector.load %arg12[%c0_52, %c0_53] : memref<100x32xf32, #tpu.memory_space<vmem>>, vector<100x32xf32>
    %cst_54 = arith.constant dense<0.000000e+00> : vector<2x32xf32>
    %171 = tpu.matmul %169, %170, %cst_54 {dimension_numbers = #tpu.dot_dimension_numbers<[1], [0], [0], [1], [0, 0, 1, 1], [], []>} : vector<2x100xf32>, vector<100x32xf32>, vector<2x32xf32> -> vector<2x32xf32>
    %172 = vector.extract_strided_slice %155 {offsets = [2, 0], sizes = [1, 32], strides = [1, 1]} : vector<3x200xf32> to vector<1x32xf32>
    %173 = vector.broadcast %172 : vector<1x32xf32> to vector<2x32xf32>
    %174 = arith.addf %171, %173 : vector<2x32xf32>
    %c0_55 = arith.constant 0 : index
    %c0_56 = arith.constant 0 : index
    %175 = vector.load %arg14[%c0_55, %c0_56] : memref<2x32xf32, #tpu.memory_space<vmem>>, vector<2x32xf32>
    tpu.vector_store %arg14[%c0_55, %c0_56], %174 {strides = array<i32>} : memref<2x32xf32, #tpu.memory_space<vmem>>, vector<2x32xf32>,
    return
  }
}

</mosaic_0001>

<llo_original>
// kernel: encode_forward.1
$region0: #{encode_forward.1}
  #allocation0 [shape = 'u32[]', space=smem, size = 0x4, offset = 0x4, fixed_abs, tag = 'smem constant byte address 0x4 - core index']
  #allocation1 [shape = 'u32[144,128]{1,0:T(1,128)}', space=vmem, size = 0x12000, scoped, tag = 'internal scratch']
  %s0 = inlined_call_operand.vmem [shape: f32[128,4], index: 0, kind: input, shape index: {}]
  %s1 = inlined_call_operand.vmem [shape: f32[12,8], index: 1, kind: input, shape index: {}]
  %s2 = inlined_call_operand.vmem [shape: f32[3,8], index: 2, kind: input, shape index: {}]
  %s3 = inlined_call_operand.vmem [shape: f32[64,128], index: 3, kind: input, shape index: {}]
  %s4 = inlined_call_operand.vmem [shape: f32[24,16], index: 4, kind: input, shape index: {}]
  %s5 = inlined_call_operand.vmem [shape: f32[3,16], index: 5, kind: input, shape index: {}]
  %s6 = inlined_call_operand.vmem [shape: f32[32,64], index: 6, kind: input, shape index: {}]
  %s7 = inlined_call_operand.vmem [shape: f32[48,32], index: 7, kind: input, shape index: {}]
  %s8 = inlined_call_operand.vmem [shape: f32[3,32], index: 8, kind: input, shape index: {}]
  %s9 = inlined_call_operand.vmem [shape: f32[16,32], index: 9, kind: input, shape index: {}]
  %s10 = inlined_call_operand.vmem [shape: f32[256,200], index: 10, kind: input, shape index: {}]
  %s11 = inlined_call_operand.vmem [shape: f32[200,100], index: 11, kind: input, shape index: {}]
  %s12 = inlined_call_operand.vmem [shape: f32[100,32], index: 12, kind: input, shape index: {}]
  %s13 = inlined_call_operand.vmem [shape: f32[3,200], index: 13, kind: input, shape index: {}]
  %s14 = inlined_call_operand.vmem [shape: f32[2,32], index: 14, kind: output, shape index: {}]
  %s15 = sld [smem:[#allocation0]]
  $region66: #{encode_forward.1} parent=0
    _
  %s17 = ssub.s32 1, %s15
  %s18 = scalar_select 0, %s17, %s15
  // Predicated region
  $region2: #{encode_forward.1} parent=0 // pred_check
    _
  $region3: #{encode_forward.1} parent=0 // pred_check_branch
    %20 = sbr.rel (0) target = $region5
  $region4: #{encode_forward.1} parent=0 // pred_region
    _
  $region5: #{encode_forward.1} parent=0 // pred_fallthru
    _
  // Predicated region
  $region6: #{encode_forward.1} parent=0 // pred_check
    _
  $region7: #{encode_forward.1} parent=0 // pred_check_branch
    %22 = sbr.rel (0) target = $region9
  $region8: #{encode_forward.1} parent=0 // pred_region
    _
  $region9: #{encode_forward.1} parent=0 // pred_fallthru
    _
  // Predicated region
  $region10: #{encode_forward.1} parent=0 // pred_check
    _
  $region11: #{encode_forward.1} parent=0 // pred_check_branch
    %24 = sbr.rel (0) target = $region13
  $region12: #{encode_forward.1} parent=0 // pred_region
    _
  $region13: #{encode_forward.1} parent=0 // pred_fallthru
    _
  // Predicated region
  $region14: #{encode_forward.1} parent=0 // pred_check
    _
  $region15: #{encode_forward.1} parent=0 // pred_check_branch
    %26 = sbr.rel (0) target = $region17
  $region16: #{encode_forward.1} parent=0 // pred_region
    _
  $region17: #{encode_forward.1} parent=0 // pred_fallthru
    _
  // Predicated region
  $region18: #{encode_forward.1} parent=0 // pred_check
    _
  $region19: #{encode_forward.1} parent=0 // pred_check_branch
    %28 = sbr.rel (0) target = $region21
  $region20: #{encode_forward.1} parent=0 // pred_region
    _
  $region21: #{encode_forward.1} parent=0 // pred_fallthru
    _
  // Predicated region
  $region22: #{encode_forward.1} parent=0 // pred_check
    _
  $region23: #{encode_forward.1} parent=0 // pred_check_branch
    %30 = sbr.rel (0) target = $region25
  $region24: #{encode_forward.1} parent=0 // pred_region
    _
  $region25: #{encode_forward.1} parent=0 // pred_fallthru
    _
  // Predicated region
  $region26: #{encode_forward.1} parent=0 // pred_check
    _
  $region27: #{encode_forward.1} parent=0 // pred_check_branch
    %32 = sbr.rel (0) target = $region29
  $region28: #{encode_forward.1} parent=0 // pred_region
    _
  $region29: #{encode_forward.1} parent=0 // pred_fallthru
    _
  // Predicated region
  $region30: #{encode_forward.1} parent=0 // pred_check
    _
  $region31: #{encode_forward.1} parent=0 // pred_check_branch
    %34 = sbr.rel (0) target = $region33
  $region32: #{encode_forward.1} parent=0 // pred_region
    _
  $region33: #{encode_forward.1} parent=0 // pred_fallthru
    _
  // Predicated region
  $region34: #{encode_forward.1} parent=0 // pred_check
    _
  $region35: #{encode_forward.1} parent=0 // pred_check_branch
    %36 = sbr.rel (0) target = $region37
  $region36: #{encode_forward.1} parent=0 // pred_region
    _
  $region37: #{encode_forward.1} parent=0 // pred_fallthru
    _
  // Predicated region
  $region38: #{encode_forward.1} parent=0 // pred_check
    _
  $region39: #{encode_forward.1} parent=0 // pred_check_branch
    %38 = sbr.rel (0) target = $region41
  $region40: #{encode_forward.1} parent=0 // pred_region
    _
  $region41: #{encode_forward.1} parent=0 // pred_fallthru
    _
  // Predicated region
  $region42: #{encode_forward.1} parent=0 // pred_check
    _
  $region43: #{encode_forward.1} parent=0 // pred_check_branch
    %40 = sbr.rel (0) target = $region45
  $region44: #{encode_forward.1} parent=0 // pred_region
    _
  $region45: #{encode_forward.1} parent=0 // pred_fallthru
    _
  // Predicated region
  $region46: #{encode_forward.1} parent=0 // pred_check
    _
  $region47: #{encode_forward.1} parent=0 // pred_check_branch
    %42 = sbr.rel (0) target = $region49
  $region48: #{encode_forward.1} parent=0 // pred_region
    _
  $region49: #{encode_forward.1} parent=0 // pred_fallthru
    _
  // Predicated region
  $region50: #{encode_forward.1} parent=0 // pred_check
    _
  $region51: #{encode_forward.1} parent=0 // pred_check_branch
    %44 = sbr.rel (0) target = $region53
  $region52: #{encode_forward.1} parent=0 // pred_region
    _
  $region53: #{encode_forward.1} parent=0 // pred_fallthru
    _
  // Predicated region
  $region54: #{encode_forward.1} parent=0 // pred_check
    _
  $region55: #{encode_forward.1} parent=0 // pred_check_branch
    %46 = sbr.rel (0) target = $region57
  $region56: #{encode_forward.1} parent=0 // pred_region
    _
  $region57: #{encode_forward.1} parent=0 // pred_fallthru
    _
  %v47 = vld [vmem:[%s0] sm:$0xff]
  %v48 = vld [vmem:[%s0 + $0x8] sm:$0xff]
  %v49 = vld [vmem:[%s0 + $0x10] sm:$0xff]
  %v50 = vld [vmem:[%s0 + $0x18] sm:$0xff]
  %v51 = vld [vmem:[%s0 + $0x20] sm:$0xff]
  %v52 = vld [vmem:[%s0 + $0x28] sm:$0xff]
  %v53 = vld [vmem:[%s0 + $0x30] sm:$0xff]
  %v54 = vld [vmem:[%s0 + $0x38] sm:$0xff]
  %v55 = vld [vmem:[%s0 + $0x40] sm:$0xff]
  %v56 = vld [vmem:[%s0 + $0x48] sm:$0xff]
  %v57 = vld [vmem:[%s0 + $0x50] sm:$0xff]
  %v58 = vld [vmem:[%s0 + $0x58] sm:$0xff]
  %v59 = vld [vmem:[%s0 + $0x60] sm:$0xff]
  %v60 = vld [vmem:[%s0 + $0x68] sm:$0xff]
  %v61 = vld [vmem:[%s0 + $0x70] sm:$0xff]
  %v62 = vld [vmem:[%s0 + $0x78] sm:$0xff]
  %v63 = vld [vmem:[%s1] sm:$0xff]
  %v64 = vld [vmem:[%s1 + $0x8] sm:$0xf]
  %v65 = vld [vmem:[%s2] sm:$0x7]
  %v66 = vld [vmem:[%s3] sm:$0xff]
  %v67 = vld [vmem:[%s3 + $0x8] sm:$0xff]
  %v68 = vld [vmem:[%s3 + $0x10] sm:$0xff]
  %v69 = vld [vmem:[%s3 + $0x18] sm:$0xff]
  %v70 = vld [vmem:[%s3 + $0x20] sm:$0xff]
  %v71 = vld [vmem:[%s3 + $0x28] sm:$0xff]
  %v72 = vld [vmem:[%s3 + $0x30] sm:$0xff]
  %v73 = vld [vmem:[%s3 + $0x38] sm:$0xff]
  %v76 = vrot.slane %v54, 7
  %v77 = vrot.slane %v62, 7
  %vm94 = vcmask 1040384
  %v95 = vrot.slane %v47, 7
  %v96 = vrot.slane %v48, 7
  %v97 = vsel %vm94, %v95, %v96
  %v98 = vrot.slane %v49, 7
  %v99 = vsel %vm94, %v96, %v98
  %v100 = vrot.slane %v50, 7
  %v101 = vsel %vm94, %v98, %v100
  %v102 = vrot.slane %v51, 7
  %v103 = vsel %vm94, %v100, %v102
  %v104 = vrot.slane %v52, 7
  %v105 = vsel %vm94, %v102, %v104
  %v106 = vrot.slane %v53, 7
  %v107 = vsel %vm94, %v104, %v106
  %v108 = vsel %vm94, %v106, %v76
  %v109 = vrot.slane %v55, 7
  %v110 = vrot.slane %v56, 7
  %v111 = vsel %vm94, %v109, %v110
  %v112 = vrot.slane %v57, 7
  %v113 = vsel %vm94, %v110, %v112
  %v114 = vrot.slane %v58, 7
  %v115 = vsel %vm94, %v112, %v114
  %v116 = vrot.slane %v59, 7
  %v117 = vsel %vm94, %v114, %v116
  %v118 = vrot.slane %v60, 7
  %v119 = vsel %vm94, %v116, %v118
  %v120 = vrot.slane %v61, 7
  %v121 = vsel %vm94, %v118, %v120
  %v122 = vsel %vm94, %v120, %v77
  %v139 = vsel %vm94, %v76, %v95
  %v140 = vsel %vm94, %v77, %v109
  %vm143 = vcmask 1046528
  %v144 = vrot.slane %v139, 1
  %v145 = vrot.slane %v97, 1
  %v146 = vsel %vm143, %v144, %v145
  %v147 = vrot.slane %v99, 1
  %v148 = vsel %vm143, %v145, %v147
  %v149 = vrot.slane %v101, 1
  %v150 = vsel %vm143, %v147, %v149
  %v151 = vrot.slane %v103, 1
  %v152 = vsel %vm143, %v149, %v151
  %v153 = vrot.slane %v105, 1
  %v154 = vsel %vm143, %v151, %v153
  %v155 = vrot.slane %v107, 1
  %v156 = vsel %vm143, %v153, %v155
  %v157 = vrot.slane %v108, 1
  %v158 = vsel %vm143, %v155, %v157
  %v159 = vsel %vm143, %v157, %v144
  %v160 = vrot.slane %v140, 1
  %v161 = vrot.slane %v111, 1
  %v162 = vsel %vm143, %v160, %v161
  %v163 = vrot.slane %v113, 1
  %v164 = vsel %vm143, %v161, %v163
  %v165 = vrot.slane %v115, 1
  %v166 = vsel %vm143, %v163, %v165
  %v167 = vrot.slane %v117, 1
  %v168 = vsel %vm143, %v165, %v167
  %v169 = vrot.slane %v119, 1
  %v170 = vsel %vm143, %v167, %v169
  %v171 = vrot.slane %v121, 1
  %v172 = vsel %vm143, %v169, %v171
  %v173 = vrot.slane %v122, 1
  %v174 = vsel %vm143, %v171, %v173
  %v175 = vsel %vm143, %v173, %v160
  %176 = vrot.lane.b32.xlu0 %v146, 4
  %v177 = vpop.permute.xlu0 %176
  %178 = vrot.lane.b32.xlu0 %v148, 4
  %v179 = vpop.permute.xlu0 %178
  %180 = vrot.lane.b32.xlu0 %v150, 4
  %v181 = vpop.permute.xlu0 %180
  %182 = vrot.lane.b32.xlu0 %v152, 4
  %v183 = vpop.permute.xlu0 %182
  %184 = vrot.lane.b32.xlu0 %v154, 4
  %v185 = vpop.permute.xlu0 %184
  %186 = vrot.lane.b32.xlu0 %v156, 4
  %v187 = vpop.permute.xlu0 %186
  %188 = vrot.lane.b32.xlu0 %v158, 4
  %v189 = vpop.permute.xlu0 %188
  %190 = vrot.lane.b32.xlu0 %v159, 4
  %v191 = vpop.permute.xlu0 %190
  %192 = vrot.lane.b32.xlu0 %v162, 4
  %v193 = vpop.permute.xlu0 %192
  %194 = vrot.lane.b32.xlu0 %v164, 4
  %v195 = vpop.permute.xlu0 %194
  %196 = vrot.lane.b32.xlu0 %v166, 4
  %v197 = vpop.permute.xlu0 %196
  %198 = vrot.lane.b32.xlu0 %v168, 4
  %v199 = vpop.permute.xlu0 %198
  %200 = vrot.lane.b32.xlu0 %v170, 4
  %v201 = vpop.permute.xlu0 %200
  %202 = vrot.lane.b32.xlu0 %v172, 4
  %v203 = vpop.permute.xlu0 %202
  %204 = vrot.lane.b32.xlu0 %v174, 4
  %v205 = vpop.permute.xlu0 %204
  %206 = vrot.lane.b32.xlu0 %v175, 4
  %v207 = vpop.permute.xlu0 %206
  %vm224 = vcmask 1045504
  %v225 = vrot.slane %v139, 2
  %v226 = vrot.slane %v97, 2
  %v227 = vsel %vm224, %v225, %v226
  %v228 = vrot.slane %v99, 2
  %v229 = vsel %vm224, %v226, %v228
  %v230 = vrot.slane %v101, 2
  %v231 = vsel %vm224, %v228, %v230
  %v232 = vrot.slane %v103, 2
  %v233 = vsel %vm224, %v230, %v232
  %v234 = vrot.slane %v105, 2
  %v235 = vsel %vm224, %v232, %v234
  %v236 = vrot.slane %v107, 2
  %v237 = vsel %vm224, %v234, %v236
  %v238 = vrot.slane %v108, 2
  %v239 = vsel %vm224, %v236, %v238
  %v240 = vsel %vm224, %v238, %v225
  %v241 = vrot.slane %v140, 2
  %v242 = vrot.slane %v111, 2
  %v243 = vsel %vm224, %v241, %v242
  %v244 = vrot.slane %v113, 2
  %v245 = vsel %vm224, %v242, %v244
  %v246 = vrot.slane %v115, 2
  %v247 = vsel %vm224, %v244, %v246
  %v248 = vrot.slane %v117, 2
  %v249 = vsel %vm224, %v246, %v248
  %v250 = vrot.slane %v119, 2
  %v251 = vsel %vm224, %v248, %v250
  %v252 = vrot.slane %v121, 2
  %v253 = vsel %vm224, %v250, %v252
  %v254 = vrot.slane %v122, 2
  %v255 = vsel %vm224, %v252, %v254
  %v256 = vsel %vm224, %v254, %v241
  %257 = vrot.lane.b32.xlu0 %v227, 8
  %v258 = vpop.permute.xlu0 %257
  %259 = vrot.lane.b32.xlu0 %v229, 8
  %v260 = vpop.permute.xlu0 %259
  %261 = vrot.lane.b32.xlu0 %v231, 8
  %v262 = vpop.permute.xlu0 %261
  %263 = vrot.lane.b32.xlu0 %v233, 8
  %v264 = vpop.permute.xlu0 %263
  %265 = vrot.lane.b32.xlu0 %v235, 8
  %v266 = vpop.permute.xlu0 %265
  %267 = vrot.lane.b32.xlu0 %v237, 8
  %v268 = vpop.permute.xlu0 %267
  %269 = vrot.lane.b32.xlu0 %v239, 8
  %v270 = vpop.permute.xlu0 %269
  %271 = vrot.lane.b32.xlu0 %v240, 8
  %v272 = vpop.permute.xlu0 %271
  %273 = vrot.lane.b32.xlu0 %v243, 8
  %v274 = vpop.permute.xlu0 %273
  %275 = vrot.lane.b32.xlu0 %v245, 8
  %v276 = vpop.permute.xlu0 %275
  %277 = vrot.lane.b32.xlu0 %v247, 8
  %v278 = vpop.permute.xlu0 %277
  %279 = vrot.lane.b32.xlu0 %v249, 8
  %v280 = vpop.permute.xlu0 %279
  %281 = vrot.lane.b32.xlu0 %v251, 8
  %v282 = vpop.permute.xlu0 %281
  %283 = vrot.lane.b32.xlu0 %v253, 8
  %v284 = vpop.permute.xlu0 %283
  %285 = vrot.lane.b32.xlu0 %v255, 8
  %v286 = vpop.permute.xlu0 %285
  %287 = vrot.lane.b32.xlu0 %v256, 8
  %v288 = vpop.permute.xlu0 %287
  %vm305 = vcmask 31744
  %v306 = vsel %vm305, %v139, %v177
  %v307 = vsel %vm305, %v97, %v179
  %v308 = vsel %vm305, %v99, %v181
  %v309 = vsel %vm305, %v101, %v183
  %v310 = vsel %vm305, %v103, %v185
  %v311 = vsel %vm305, %v105, %v187
  %v312 = vsel %vm305, %v107, %v189
  %v313 = vsel %vm305, %v108, %v191
  %v314 = vsel %vm305, %v140, %v193
  %v315 = vsel %vm305, %v111, %v195
  %v316 = vsel %vm305, %v113, %v197
  %v317 = vsel %vm305, %v115, %v199
  %v318 = vsel %vm305, %v117, %v201
  %v319 = vsel %vm305, %v119, %v203
  %v320 = vsel %vm305, %v121, %v205
  %v321 = vsel %vm305, %v122, %v207
  %vm322 = vcmask 64512
  %v323 = vsel %vm322, %v306, %v258
  %v324 = vsel %vm322, %v307, %v260
  %v325 = vsel %vm322, %v308, %v262
  %v326 = vsel %vm322, %v309, %v264
  %v327 = vsel %vm322, %v310, %v266
  %v328 = vsel %vm322, %v311, %v268
  %v329 = vsel %vm322, %v312, %v270
  %v330 = vsel %vm322, %v313, %v272
  %v331 = vsel %vm322, %v314, %v274
  %v332 = vsel %vm322, %v315, %v276
  %v333 = vsel %vm322, %v316, %v278
  %v334 = vsel %vm322, %v317, %v280
  %v335 = vsel %vm322, %v318, %v282
  %v336 = vsel %vm322, %v319, %v284
  %v337 = vsel %vm322, %v320, %v286
  %v338 = vsel %vm322, %v321, %v288
  %v339 = vlaneseq
  %v340 = vshrl.u32 %v339, 7
  %v341 = vsub.s32 0, %v340
  %v342 = vrot.slane %v65, %v341
  %vm343 = vcmask 97280
  %v345 = vsel %vm343, %v323, 0
  %v348 = vsel %vm343, %v324, 0
  %v351 = vsel %vm343, %v325, 0
  %v354 = vsel %vm343, %v326, 0
  %v357 = vsel %vm343, %v327, 0
  %v360 = vsel %vm343, %v328, 0
  %v363 = vsel %vm343, %v329, 0
  %v366 = vsel %vm343, %v330, 0
  %v369 = vsel %vm343, %v331, 0
  %v372 = vsel %vm343, %v332, 0
  %v375 = vsel %vm343, %v333, 0
  %v378 = vsel %vm343, %v334, 0
  %v381 = vsel %vm343, %v335, 0
  %v384 = vsel %vm343, %v336, 0
  %v387 = vsel %vm343, %v337, 0
  %v390 = vsel %vm343, %v338, 0
  %vm392 = vcmask 1043456
  %v394 = vsel %vm392, %v64, 0
  %396 = vmatprep.subr.mxu0 0.0
  %397 = vmatpush1.msra.mxu0 %v63
  %398 = vmatprep.subr.mxu0 0.0
  %399 = vmatpush1.msra.mxu0 %v394
  %400 = vmatprep.subr.mxu0 0.0
  %401 = vmatpush1.msra.mxu0 0.0
  %402 = vmatprep.subr.mxu0 0.0
  %403 = vmatpush1.msra.mxu0 0.0
  %404 = vmatprep.subr.mxu0 0.0
  %405 = vmatpush1.msra.mxu0 0.0
  %406 = vmatprep.subr.mxu0 0.0
  %407 = vmatpush1.msra.mxu0 0.0
  %408 = vmatprep.subr.mxu0 0.0
  %409 = vmatpush1.msra.mxu0 0.0
  %410 = vmatprep.subr.mxu0 0.0
  %411 = vmatpush1.msra.mxu0 0.0
  %412 = vmatprep.subr.mxu0 0.0
  %413 = vmatpush1.msra.mxu0 0.0
  %414 = vmatprep.subr.mxu0 0.0
  %415 = vmatpush1.msra.mxu0 0.0
  %416 = vmatprep.subr.mxu0 0.0
  %417 = vmatpush1.msra.mxu0 0.0
  %418 = vmatprep.subr.mxu0 0.0
  %419 = vmatpush1.msra.mxu0 0.0
  %420 = vmatprep.subr.mxu0 0.0
  %421 = vmatpush1.msra.mxu0 0.0
  %422 = vmatprep.subr.mxu0 0.0
  %423 = vmatpush1.msra.mxu0 0.0
  %424 = vmatprep.subr.mxu0 0.0
  %425 = vmatpush1.msra.mxu0 0.0
  %426 = vmatprep.subr.mxu0 0.0
  %427 = vmatpush1.msra.mxu0 0.0
  %428 = vmatprep.subr.mxu0 0.0
  %429 = vmatpush1.msra.mxu0 0.0
  %430 = vmatprep.subr.mxu0 0.0
  %431 = vmatpush1.msra.mxu0 0.0
  %432 = vmatprep.subr.mxu0 0.0
  %433 = vmatpush1.msra.mxu0 0.0
  %434 = vmatprep.subr.mxu0 0.0
  %435 = vmatpush1.msra.mxu0 0.0
  %436 = vmatprep.subr.mxu0 0.0
  %437 = vmatpush1.msra.mxu0 0.0
  %438 = vmatprep.subr.mxu0 0.0
  %439 = vmatpush1.msra.mxu0 0.0
  %440 = vmatprep.subr.mxu0 0.0
  %441 = vmatpush1.msra.mxu0 0.0
  %442 = vmatprep.subr.mxu0 0.0
  %443 = vmatpush1.msra.mxu0 0.0
  %444 = vmatprep.subr.mxu0 0.0
  %445 = vmatpush1.msra.mxu0 0.0
  %446 = vmatprep.subr.mxu0 0.0
  %447 = vmatpush1.msra.mxu0 0.0
  %448 = vmatprep.subr.mxu0 0.0
  %449 = vmatpush1.msra.mxu0 0.0
  %450 = vmatprep.subr.mxu0 0.0
  %451 = vmatpush1.msra.mxu0 0.0
  %452 = vmatprep.subr.mxu0 0.0
  %453 = vmatpush1.msra.mxu0 0.0
  %454 = vmatprep.subr.mxu0 0.0
  %455 = vmatpush1.msra.mxu0 0.0
  %456 = vmatprep.subr.mxu0 0.0
  %457 = vmatpush1.msra.mxu0 0.0
  %458 = vmatprep.subr.mxu0 0.0
  %459 = vmatpush1.msra.mxu0 0.0
  %460 = vmatprep.mubr.f32.mxu0 0.0
  %461 = vmatmul.mubr.f32.gmra.mrb[0].mxu0 %v345
  %v462 = vpop.f32.mrb[0].mxu0
  %v463 = vadd.f32 %v342, %v462
  %v464 = vpop.f32.mrb[0].mxu0
  %465 = vmatprep.mubr.f32.mxu0 0.0
  %466 = vmatmul.mubr.f32.gmra.mrb[0].mxu0 %v348
  %v467 = vpop.f32.mrb[0].mxu0
  %v468 = vadd.f32 %v342, %v467
  %v469 = vpop.f32.mrb[0].mxu0
  %470 = vmatprep.mubr.f32.mxu0 0.0
  %471 = vmatmul.mubr.f32.gmra.mrb[0].mxu0 %v351
  %v472 = vpop.f32.mrb[0].mxu0
  %v473 = vadd.f32 %v342, %v472
  %v474 = vpop.f32.mrb[0].mxu0
  %475 = vmatprep.mubr.f32.mxu0 0.0
  %476 = vmatmul.mubr.f32.gmra.mrb[0].mxu0 %v354
  %v477 = vpop.f32.mrb[0].mxu0
  %v478 = vadd.f32 %v342, %v477
  %v479 = vpop.f32.mrb[0].mxu0
  %480 = vmatprep.mubr.f32.mxu0 0.0
  %481 = vmatmul.mubr.f32.gmra.mrb[0].mxu0 %v357
  %v482 = vpop.f32.mrb[0].mxu0
  %v483 = vadd.f32 %v342, %v482
  %v484 = vpop.f32.mrb[0].mxu0
  %485 = vmatprep.mubr.f32.mxu0 0.0
  %486 = vmatmul.mubr.f32.gmra.mrb[0].mxu0 %v360
  %v487 = vpop.f32.mrb[0].mxu0
  %v488 = vadd.f32 %v342, %v487
  %v489 = vpop.f32.mrb[0].mxu0
  %490 = vmatprep.mubr.f32.mxu0 0.0
  %491 = vmatmul.mubr.f32.gmra.mrb[0].mxu0 %v363
  %v492 = vpop.f32.mrb[0].mxu0
  %v493 = vadd.f32 %v342, %v492
  %v494 = vpop.f32.mrb[0].mxu0
  %495 = vmatprep.mubr.f32.mxu0 0.0
  %496 = vmatmul.mubr.f32.gmra.mrb[0].mxu0 %v366
  %v497 = vpop.f32.mrb[0].mxu0
  %v498 = vadd.f32 %v342, %v497
  %v499 = vpop.f32.mrb[0].mxu0
  %500 = vmatprep.mubr.f32.mxu0 0.0
  %501 = vmatmul.mubr.f32.gmra.mrb[0].mxu0 %v369
  %v502 = vpop.f32.mrb[0].mxu0
  %v503 = vadd.f32 %v342, %v502
  %v504 = vpop.f32.mrb[0].mxu0
  %505 = vmatprep.mubr.f32.mxu0 0.0
  %506 = vmatmul.mubr.f32.gmra.mrb[0].mxu0 %v372
  %v507 = vpop.f32.mrb[0].mxu0
  %v508 = vadd.f32 %v342, %v507
  %v509 = vpop.f32.mrb[0].mxu0
  %510 = vmatprep.mubr.f32.mxu0 0.0
  %511 = vmatmul.mubr.f32.gmra.mrb[0].mxu0 %v375
  %v512 = vpop.f32.mrb[0].mxu0
  %v513 = vadd.f32 %v342, %v512
  %v514 = vpop.f32.mrb[0].mxu0
  %515 = vmatprep.mubr.f32.mxu0 0.0
  %516 = vmatmul.mubr.f32.gmra.mrb[0].mxu0 %v378
  %v517 = vpop.f32.mrb[0].mxu0
  %v518 = vadd.f32 %v342, %v517
  %v519 = vpop.f32.mrb[0].mxu0
  %520 = vmatprep.mubr.f32.mxu0 0.0
  %521 = vmatmul.mubr.f32.gmra.mrb[0].mxu0 %v381
  %v522 = vpop.f32.mrb[0].mxu0
  %v523 = vadd.f32 %v342, %v522
  %v524 = vpop.f32.mrb[0].mxu0
  %525 = vmatprep.mubr.f32.mxu0 0.0
  %526 = vmatmul.mubr.f32.gmra.mrb[0].mxu0 %v384
  %v527 = vpop.f32.mrb[0].mxu0
  %v528 = vadd.f32 %v342, %v527
  %v529 = vpop.f32.mrb[0].mxu0
  %530 = vmatprep.mubr.f32.mxu0 0.0
  %531 = vmatmul.mubr.f32.gmra.mrb[0].mxu0 %v387
  %v532 = vpop.f32.mrb[0].mxu0
  %v533 = vadd.f32 %v342, %v532
  %v534 = vpop.f32.mrb[0].mxu0
  %535 = vmatprep.mubr.f32.mxu0 0.0
  %536 = vmatmul.mubr.f32.gmra.mrb[0].mxu0 %v390
  %v537 = vpop.f32.mrb[0].mxu0
  %v538 = vadd.f32 %v342, %v537
  %v539 = vpop.f32.mrb[0].mxu0
  %540 = vdwg.mxu0
  %v541 = vmax.f32 %v463, 0.0
  %v542 = vmax.f32 %v468, 0.0
  %v543 = vmax.f32 %v473, 0.0
  %v544 = vmax.f32 %v478, 0.0
  %v545 = vmax.f32 %v483, 0.0
  %v546 = vmax.f32 %v488, 0.0
  %v547 = vmax.f32 %v493, 0.0
  %v548 = vmax.f32 %v498, 0.0
  %v549 = vmax.f32 %v503, 0.0
  %v550 = vmax.f32 %v508, 0.0
  %v551 = vmax.f32 %v513, 0.0
  %v552 = vmax.f32 %v518, 0.0
  %v553 = vmax.f32 %v523, 0.0
  %v554 = vmax.f32 %v528, 0.0
  %v555 = vmax.f32 %v533, 0.0
  %v556 = vmax.f32 %v538, 0.0
  %557 = vmatprep.subr.mxu0 0.0
  %558 = vmatpush1.msra.mxu0 %v541
  %559 = vmatprep.subr.mxu0 0.0
  %560 = vmatpush1.msra.mxu0 %v542
  %561 = vmatprep.subr.mxu0 0.0
  %562 = vmatpush1.msra.mxu0 %v543
  %563 = vmatprep.subr.mxu0 0.0
  %564 = vmatpush1.msra.mxu0 %v544
  %565 = vmatprep.subr.mxu0 0.0
  %566 = vmatpush1.msra.mxu0 %v545
  %567 = vmatprep.subr.mxu0 0.0
  %568 = vmatpush1.msra.mxu0 %v546
  %569 = vmatprep.subr.mxu0 0.0
  %570 = vmatpush1.msra.mxu0 %v547
  %571 = vmatprep.subr.mxu0 0.0
  %572 = vmatpush1.msra.mxu0 %v548
  %573 = vmatprep.subr.mxu0 0.0
  %574 = vmatpush1.msra.mxu0 %v549
  %575 = vmatprep.subr.mxu0 0.0
  %576 = vmatpush1.msra.mxu0 %v550
  %577 = vmatprep.subr.mxu0 0.0
  %578 = vmatpush1.msra.mxu0 %v551
  %579 = vmatprep.subr.mxu0 0.0
  %580 = vmatpush1.msra.mxu0 %v552
  %581 = vmatprep.subr.mxu0 0.0
  %582 = vmatpush1.msra.mxu0 %v553
  %583 = vmatprep.subr.mxu0 0.0
  %584 = vmatpush1.msra.mxu0 %v554
  %585 = vmatprep.subr.mxu0 0.0
  %586 = vmatpush1.msra.mxu0 %v555
  %587 = vmatprep.subr.mxu0 0.0
  %588 = vmatpush1.msra.mxu0 %v556
  %589 = vmatprep.subr.mxu0 0.0
  %590 = vmatpush1.msra.mxu0 0.0
  %591 = vmatprep.subr.mxu0 0.0
  %592 = vmatpush1.msra.mxu0 0.0
  %593 = vmatprep.subr.mxu0 0.0
  %594 = vmatpush1.msra.mxu0 0.0
  %595 = vmatprep.subr.mxu0 0.0
  %596 = vmatpush1.msra.mxu0 0.0
  %597 = vmatprep.subr.mxu0 0.0
  %598 = vmatpush1.msra.mxu0 0.0
  %599 = vmatprep.subr.mxu0 0.0
  %600 = vmatpush1.msra.mxu0 0.0
  %601 = vmatprep.subr.mxu0 0.0
  %602 = vmatpush1.msra.mxu0 0.0
  %603 = vmatprep.subr.mxu0 0.0
  %604 = vmatpush1.msra.mxu0 0.0
  %605 = vmatprep.subr.mxu0 0.0
  %606 = vmatpush1.msra.mxu0 0.0
  %607 = vmatprep.subr.mxu0 0.0
  %608 = vmatpush1.msra.mxu0 0.0
  %609 = vmatprep.subr.mxu0 0.0
  %610 = vmatpush1.msra.mxu0 0.0
  %611 = vmatprep.subr.mxu0 0.0
  %612 = vmatpush1.msra.mxu0 0.0
  %613 = vmatprep.subr.mxu0 0.0
  %614 = vmatpush1.msra.mxu0 0.0
  %615 = vmatprep.subr.mxu0 0.0
  %616 = vmatpush1.msra.mxu0 0.0
  %617 = vmatprep.subr.mxu0 0.0
  %618 = vmatpush1.msra.mxu0 0.0
  %619 = vmatprep.subr.mxu0 0.0
  %620 = vmatpush1.msra.mxu0 0.0
  %621 = vmatprep.mubr.f32.mxu0 0.0
  %622 = vmatmul.mubr.f32.gmra.mrb[0].mxu0 %v66
  %v623 = vpop.f32.mrb[0].mxu0
  %v624 = vadd.f32 0.0, %v623
  %v625 = vpop.f32.mrb[0].mxu0
  %626 = vmatprep.mubr.f32.mxu0 0.0
  %627 = vmatmul.mubr.f32.gmra.mrb[0].mxu0 %v67
  %v628 = vpop.f32.mrb[0].mxu0
  %v629 = vadd.f32 0.0, %v628
  %v630 = vpop.f32.mrb[0].mxu0
  %631 = vmatprep.mubr.f32.mxu0 0.0
  %632 = vmatmul.mubr.f32.gmra.mrb[0].mxu0 %v68
  %v633 = vpop.f32.mrb[0].mxu0
  %v634 = vadd.f32 0.0, %v633
  %v635 = vpop.f32.mrb[0].mxu0
  %636 = vmatprep.mubr.f32.mxu0 0.0
  %637 = vmatmul.mubr.f32.gmra.mrb[0].mxu0 %v69
  %v638 = vpop.f32.mrb[0].mxu0
  %v639 = vadd.f32 0.0, %v638
  %v640 = vpop.f32.mrb[0].mxu0
  %641 = vmatprep.mubr.f32.mxu0 0.0
  %642 = vmatmul.mubr.f32.gmra.mrb[0].mxu0 %v70
  %v643 = vpop.f32.mrb[0].mxu0
  %v644 = vadd.f32 0.0, %v643
  %v645 = vpop.f32.mrb[0].mxu0
  %646 = vmatprep.mubr.f32.mxu0 0.0
  %647 = vmatmul.mubr.f32.gmra.mrb[0].mxu0 %v71
  %v648 = vpop.f32.mrb[0].mxu0
  %v649 = vadd.f32 0.0, %v648
  %v650 = vpop.f32.mrb[0].mxu0
  %651 = vmatprep.mubr.f32.mxu0 0.0
  %652 = vmatmul.mubr.f32.gmra.mrb[0].mxu0 %v72
  %v653 = vpop.f32.mrb[0].mxu0
  %v654 = vadd.f32 0.0, %v653
  %v655 = vpop.f32.mrb[0].mxu0
  %656 = vmatprep.mubr.f32.mxu0 0.0
  %657 = vmatmul.mubr.f32.gmra.mrb[0].mxu0 %v73
  %v658 = vpop.f32.mrb[0].mxu0
  %v659 = vadd.f32 0.0, %v658
  %v660 = vpop.f32.mrb[0].mxu0
  %661 = vdwg.mxu0
  %v662 = vsel %vm322, %v624, 0.0
  %v663 = vsel %vm322, %v629, 0.0
  %v664 = vadd.f32 %v662, %v663
  %v665 = vsel %vm322, %v634, 0.0
  %v666 = vadd.f32 %v664, %v665
  %v667 = vsel %vm322, %v639, 0.0
  %v668 = vadd.f32 %v666, %v667
  %v669 = vsel %vm322, %v644, 0.0
  %v670 = vadd.f32 %v668, %v669
  %v671 = vsel %vm322, %v649, 0.0
  %v672 = vadd.f32 %v670, %v671
  %v673 = vsel %vm322, %v654, 0.0
  %v674 = vadd.f32 %v672, %v673
  %v675 = vsel %vm322, %v659, 0.0
  %v676 = vadd.f32 %v674, %v675
  %v677 = vrot.slane %v676, 4
  %v678 = vadd.f32 %v676, %v677
  %v679 = vrot.slane %v678, 2
  %v680 = vadd.f32 %v678, %v679
  %v681 = vrot.slane %v680, 1
  %v682 = vadd.f32 %v680, %v681
  %v683 = vrcp.pop 64.0
  %v684 = vmul.f32 %v682, %v683
  %v685 = vsub.f32 %v624, %v684
  %v686 = vsub.f32 %v629, %v684
  %v687 = vsub.f32 %v634, %v684
  %v688 = vsub.f32 %v639, %v684
  %v689 = vsub.f32 %v644, %v684
  %v690 = vsub.f32 %v649, %v684
  %v691 = vsub.f32 %v654, %v684
  %v692 = vsub.f32 %v659, %v684
  %v693 = vmul.f32 %v685, %v685
  %v694 = vmul.f32 %v686, %v686
  %v695 = vmul.f32 %v687, %v687
  %v696 = vmul.f32 %v688, %v688
  %v697 = vmul.f32 %v689, %v689
  %v698 = vmul.f32 %v690, %v690
  %v699 = vmul.f32 %v691, %v691
  %v700 = vmul.f32 %v692, %v692
  %v701 = vsel %vm322, %v693, 0.0
  %v702 = vsel %vm322, %v694, 0.0
  %v703 = vadd.f32 %v701, %v702
  %v704 = vsel %vm322, %v695, 0.0
  %v705 = vadd.f32 %v703, %v704
  %v706 = vsel %vm322, %v696, 0.0
  %v707 = vadd.f32 %v705, %v706
  %v708 = vsel %vm322, %v697, 0.0
  %v709 = vadd.f32 %v707, %v708
  %v710 = vsel %vm322, %v698, 0.0
  %v711 = vadd.f32 %v709, %v710
  %v712 = vsel %vm322, %v699, 0.0
  %v713 = vadd.f32 %v711, %v712
  %v714 = vsel %vm322, %v700, 0.0
  %v715 = vadd.f32 %v713, %v714
  %v716 = vrot.slane %v715, 4
  %v717 = vadd.f32 %v715, %v716
  %v718 = vrot.slane %v717, 2
  %v719 = vadd.f32 %v717, %v718
  %v720 = vrot.slane %v719, 1
  %v721 = vadd.f32 %v719, %v720
  %v722 = vmul.f32 %v721, %v683
  %v723 = vadd.f32 %v722, 1e-05
  %v724 = vrsqrt.pop %v723
  %v725 = vmul.f32 %v685, %v724
  %v726 = vmul.f32 %v686, %v724
  %v727 = vmul.f32 %v687, %v724
  %v728 = vmul.f32 %v688, %v724
  %v729 = vmul.f32 %v689, %v724
  %v730 = vmul.f32 %v690, %v724
  %v731 = vmul.f32 %v691, %v724
  %v732 = vmul.f32 %v692, %v724
  %v733 = vlaneseq
  %v734 = vshrl.u32 %v733, 7
  %v735 = vsub.s32 1, %v734
  %v736 = vrot.slane %v65, %v735
  %v737 = vmul.f32 %v725, %v736
  %v738 = vmul.f32 %v726, %v736
  %v739 = vmul.f32 %v727, %v736
  %v740 = vmul.f32 %v728, %v736
  %v741 = vmul.f32 %v729, %v736
  %v742 = vmul.f32 %v730, %v736
  %v743 = vmul.f32 %v731, %v736
  %v744 = vmul.f32 %v732, %v736
  %v745 = vlaneseq
  %v746 = vshrl.u32 %v745, 7
  %v747 = vsub.s32 2, %v746
  %v748 = vrot.slane %v65, %v747
  %v749 = vadd.f32 %v737, %v748
  %v750 = vadd.f32 %v738, %v748
  %v751 = vadd.f32 %v739, %v748
  %v752 = vadd.f32 %v740, %v748
  %v753 = vadd.f32 %v741, %v748
  %v754 = vadd.f32 %v742, %v748
  %v755 = vadd.f32 %v743, %v748
  %v756 = vadd.f32 %v744, %v748
  %v757 = vld [vmem:[%s4] sm:$0xff]
  %v758 = vld [vmem:[%s4 + $0x8] sm:$0xff]
  %v759 = vld [vmem:[%s4 + $0x10] sm:$0xff]
  %v760 = vld [vmem:[%s5] sm:$0x7]
  %v761 = vld [vmem:[%s6] sm:$0xff]
  %v762 = vld [vmem:[%s6 + $0x8] sm:$0xff]
  %v763 = vld [vmem:[%s6 + $0x10] sm:$0xff]
  %v764 = vld [vmem:[%s6 + $0x18] sm:$0xff]
  %v767 = vrot.slane %v752, 7
  %v768 = vrot.slane %v756, 7
  %v777 = vrot.slane %v749, 7
  %v778 = vrot.slane %v750, 7
  %v779 = vsel %vm94, %v777, %v778
  %v780 = vrot.slane %v751, 7
  %v781 = vsel %vm94, %v778, %v780
  %v782 = vsel %vm94, %v780, %v767
  %v783 = vrot.slane %v753, 7
  %v784 = vrot.slane %v754, 7
  %v785 = vsel %vm94, %v783, %v784
  %v786 = vrot.slane %v755, 7
  %v787 = vsel %vm94, %v784, %v786
  %v788 = vsel %vm94, %v786, %v768
  %v797 = vsel %vm94, %v767, %v777
  %v798 = vsel %vm94, %v768, %v783
  %v801 = vrot.slane %v797, 1
  %v802 = vrot.slane %v779, 1
  %v803 = vsel %vm143, %v801, %v802
  %v804 = vrot.slane %v781, 1
  %v805 = vsel %vm143, %v802, %v804
  %v806 = vrot.slane %v782, 1
  %v807 = vsel %vm143, %v804, %v806
  %v808 = vsel %vm143, %v806, %v801
  %v809 = vrot.slane %v798, 1
  %v810 = vrot.slane %v785, 1
  %v811 = vsel %vm143, %v809, %v810
  %v812 = vrot.slane %v787, 1
  %v813 = vsel %vm143, %v810, %v812
  %v814 = vrot.slane %v788, 1
  %v815 = vsel %vm143, %v812, %v814
  %v816 = vsel %vm143, %v814, %v809
  %817 = vrot.lane.b32.xlu0 %v803, 8
  %v818 = vpop.permute.xlu0 %817
  %819 = vrot.lane.b32.xlu0 %v805, 8
  %v820 = vpop.permute.xlu0 %819
  %821 = vrot.lane.b32.xlu0 %v807, 8
  %v822 = vpop.permute.xlu0 %821
  %823 = vrot.lane.b32.xlu0 %v808, 8
  %v824 = vpop.permute.xlu0 %823
  %825 = vrot.lane.b32.xlu0 %v811, 8
  %v826 = vpop.permute.xlu0 %825
  %827 = vrot.lane.b32.xlu0 %v813, 8
  %v828 = vpop.permute.xlu0 %827
  %829 = vrot.lane.b32.xlu0 %v815, 8
  %v830 = vpop.permute.xlu0 %829
  %831 = vrot.lane.b32.xlu0 %v816, 8
  %v832 = vpop.permute.xlu0 %831
  %v841 = vrot.slane %v797, 2
  %v842 = vrot.slane %v779, 2
  %v843 = vsel %vm224, %v841, %v842
  %v844 = vrot.slane %v781, 2
  %v845 = vsel %vm224, %v842, %v844
  %v846 = vrot.slane %v782, 2
  %v847 = vsel %vm224, %v844, %v846
  %v848 = vsel %vm224, %v846, %v841
  %v849 = vrot.slane %v798, 2
  %v850 = vrot.slane %v785, 2
  %v851 = vsel %vm224, %v849, %v850
  %v852 = vrot.slane %v787, 2
  %v853 = vsel %vm224, %v850, %v852
  %v854 = vrot.slane %v788, 2
  %v855 = vsel %vm224, %v852, %v854
  %v856 = vsel %vm224, %v854, %v849
  %857 = vrot.lane.b32.xlu0 %v843, 16
  %v858 = vpop.permute.xlu0 %857
  %859 = vrot.lane.b32.xlu0 %v845, 16
  %v860 = vpop.permute.xlu0 %859
  %861 = vrot.lane.b32.xlu0 %v847, 16
  %v862 = vpop.permute.xlu0 %861
  %863 = vrot.lane.b32.xlu0 %v848, 16
  %v864 = vpop.permute.xlu0 %863
  %865 = vrot.lane.b32.xlu0 %v851, 16
  %v866 = vpop.permute.xlu0 %865
  %867 = vrot.lane.b32.xlu0 %v853, 16
  %v868 = vpop.permute.xlu0 %867
  %869 = vrot.lane.b32.xlu0 %v855, 16
  %v870 = vpop.permute.xlu0 %869
  %871 = vrot.lane.b32.xlu0 %v856, 16
  %v872 = vpop.permute.xlu0 %871
  %v881 = vsel %vm322, %v797, %v818
  %v882 = vsel %vm322, %v779, %v820
  %v883 = vsel %vm322, %v781, %v822
  %v884 = vsel %vm322, %v782, %v824
  %v885 = vsel %vm322, %v798, %v826
  %v886 = vsel %vm322, %v785, %v828
  %v887 = vsel %vm322, %v787, %v830
  %v888 = vsel %vm322, %v788, %v832
  %vm889 = vcmask 130048
  %v890 = vsel %vm889, %v881, %v858
  %v891 = vsel %vm889, %v882, %v860
  %v892 = vsel %vm889, %v883, %v862
  %v893 = vsel %vm889, %v884, %v864
  %v894 = vsel %vm889, %v885, %v866
  %v895 = vsel %vm889, %v886, %v868
  %v896 = vsel %vm889, %v887, %v870
  %v897 = vsel %vm889, %v888, %v872
  %v898 = vlaneseq
  %v899 = vshrl.u32 %v898, 7
  %v900 = vsub.s32 0, %v899
  %v901 = vrot.slane %v760, %v900
  %vm902 = vcmask 195584
  %v904 = vsel %vm902, %v890, 0
  %v907 = vsel %vm902, %v891, 0
  %v910 = vsel %vm902, %v892, 0
  %v913 = vsel %vm902, %v893, 0
  %v916 = vsel %vm902, %v894, 0
  %v919 = vsel %vm902, %v895, 0
  %v922 = vsel %vm902, %v896, 0
  %v925 = vsel %vm902, %v897, 0
  %927 = vmatprep.subr.mxu0 0.0
  %928 = vmatpush1.msra.mxu0 %v757
  %929 = vmatprep.subr.mxu0 0.0
  %930 = vmatpush1.msra.mxu0 %v758
  %931 = vmatprep.subr.mxu0 0.0
  %932 = vmatpush1.msra.mxu0 %v759
  %933 = vmatprep.subr.mxu0 0.0
  %934 = vmatpush1.msra.mxu0 0.0
  %935 = vmatprep.subr.mxu0 0.0
  %936 = vmatpush1.msra.mxu0 0.0
  %937 = vmatprep.subr.mxu0 0.0
  %938 = vmatpush1.msra.mxu0 0.0
  %939 = vmatprep.subr.mxu0 0.0
  %940 = vmatpush1.msra.mxu0 0.0
  %941 = vmatprep.subr.mxu0 0.0
  %942 = vmatpush1.msra.mxu0 0.0
  %943 = vmatprep.subr.mxu0 0.0
  %944 = vmatpush1.msra.mxu0 0.0
  %945 = vmatprep.subr.mxu0 0.0
  %946 = vmatpush1.msra.mxu0 0.0
  %947 = vmatprep.subr.mxu0 0.0
  %948 = vmatpush1.msra.mxu0 0.0
  %949 = vmatprep.subr.mxu0 0.0
  %950 = vmatpush1.msra.mxu0 0.0
  %951 = vmatprep.subr.mxu0 0.0
  %952 = vmatpush1.msra.mxu0 0.0
  %953 = vmatprep.subr.mxu0 0.0
  %954 = vmatpush1.msra.mxu0 0.0
  %955 = vmatprep.subr.mxu0 0.0
  %956 = vmatpush1.msra.mxu0 0.0
  %957 = vmatprep.subr.mxu0 0.0
  %958 = vmatpush1.msra.mxu0 0.0
  %959 = vmatprep.subr.mxu0 0.0
  %960 = vmatpush1.msra.mxu0 0.0
  %961 = vmatprep.subr.mxu0 0.0
  %962 = vmatpush1.msra.mxu0 0.0
  %963 = vmatprep.subr.mxu0 0.0
  %964 = vmatpush1.msra.mxu0 0.0
  %965 = vmatprep.subr.mxu0 0.0
  %966 = vmatpush1.msra.mxu0 0.0
  %967 = vmatprep.subr.mxu0 0.0
  %968 = vmatpush1.msra.mxu0 0.0
  %969 = vmatprep.subr.mxu0 0.0
  %970 = vmatpush1.msra.mxu0 0.0
  %971 = vmatprep.subr.mxu0 0.0
  %972 = vmatpush1.msra.mxu0 0.0
  %973 = vmatprep.subr.mxu0 0.0
  %974 = vmatpush1.msra.mxu0 0.0
  %975 = vmatprep.subr.mxu0 0.0
  %976 = vmatpush1.msra.mxu0 0.0
  %977 = vmatprep.subr.mxu0 0.0
  %978 = vmatpush1.msra.mxu0 0.0
  %979 = vmatprep.subr.mxu0 0.0
  %980 = vmatpush1.msra.mxu0 0.0
  %981 = vmatprep.subr.mxu0 0.0
  %982 = vmatpush1.msra.mxu0 0.0
  %983 = vmatprep.subr.mxu0 0.0
  %984 = vmatpush1.msra.mxu0 0.0
  %985 = vmatprep.subr.mxu0 0.0
  %986 = vmatpush1.msra.mxu0 0.0
  %987 = vmatprep.subr.mxu0 0.0
  %988 = vmatpush1.msra.mxu0 0.0
  %989 = vmatprep.subr.mxu0 0.0
  %990 = vmatpush1.msra.mxu0 0.0
  %991 = vmatprep.mubr.f32.mxu0 0.0
  %992 = vmatmul.mubr.f32.gmra.mrb[0].mxu0 %v904
  %v993 = vpop.f32.mrb[0].mxu0
  %v994 = vadd.f32 %v901, %v993
  %v995 = vpop.f32.mrb[0].mxu0
  %996 = vmatprep.mubr.f32.mxu0 0.0
  %997 = vmatmul.mubr.f32.gmra.mrb[0].mxu0 %v907
  %v998 = vpop.f32.mrb[0].mxu0
  %v999 = vadd.f32 %v901, %v998
  %v1000 = vpop.f32.mrb[0].mxu0
  %1001 = vmatprep.mubr.f32.mxu0 0.0
  %1002 = vmatmul.mubr.f32.gmra.mrb[0].mxu0 %v910
  %v1003 = vpop.f32.mrb[0].mxu0
  %v1004 = vadd.f32 %v901, %v1003
  %v1005 = vpop.f32.mrb[0].mxu0
  %1006 = vmatprep.mubr.f32.mxu0 0.0
  %1007 = vmatmul.mubr.f32.gmra.mrb[0].mxu0 %v913
  %v1008 = vpop.f32.mrb[0].mxu0
  %v1009 = vadd.f32 %v901, %v1008
  %v1010 = vpop.f32.mrb[0].mxu0
  %1011 = vmatprep.mubr.f32.mxu0 0.0
  %1012 = vmatmul.mubr.f32.gmra.mrb[0].mxu0 %v916
  %v1013 = vpop.f32.mrb[0].mxu0
  %v1014 = vadd.f32 %v901, %v1013
  %v1015 = vpop.f32.mrb[0].mxu0
  %1016 = vmatprep.mubr.f32.mxu0 0.0
  %1017 = vmatmul.mubr.f32.gmra.mrb[0].mxu0 %v919
  %v1018 = vpop.f32.mrb[0].mxu0
  %v1019 = vadd.f32 %v901, %v1018
  %v1020 = vpop.f32.mrb[0].mxu0
  %1021 = vmatprep.mubr.f32.mxu0 0.0
  %1022 = vmatmul.mubr.f32.gmra.mrb[0].mxu0 %v922
  %v1023 = vpop.f32.mrb[0].mxu0
  %v1024 = vadd.f32 %v901, %v1023
  %v1025 = vpop.f32.mrb[0].mxu0
  %1026 = vmatprep.mubr.f32.mxu0 0.0
  %1027 = vmatmul.mubr.f32.gmra.mrb[0].mxu0 %v925
  %v1028 = vpop.f32.mrb[0].mxu0
  %v1029 = vadd.f32 %v901, %v1028
  %v1030 = vpop.f32.mrb[0].mxu0
  %1031 = vdwg.mxu0
  %v1032 = vmax.f32 %v994, 0.0
  %v1033 = vmax.f32 %v999, 0.0
  %v1034 = vmax.f32 %v1004, 0.0
  %v1035 = vmax.f32 %v1009, 0.0
  %v1036 = vmax.f32 %v1014, 0.0
  %v1037 = vmax.f32 %v1019, 0.0
  %v1038 = vmax.f32 %v1024, 0.0
  %v1039 = vmax.f32 %v1029, 0.0
  %vm1040 = vcmask 523264
  %v1042 = vsel %vm1040, %v761, 0
  %v1045 = vsel %vm1040, %v762, 0
  %v1048 = vsel %vm1040, %v763, 0
  %v1051 = vsel %vm1040, %v764, 0
  %1053 = vmatprep.subr.mxu0 0.0
  %1054 = vmatpush1.msra.mxu0 %v1032
  %1055 = vmatprep.subr.mxu0 0.0
  %1056 = vmatpush1.msra.mxu0 %v1033
  %1057 = vmatprep.subr.mxu0 0.0
  %1058 = vmatpush1.msra.mxu0 %v1034
  %1059 = vmatprep.subr.mxu0 0.0
  %1060 = vmatpush1.msra.mxu0 %v1035
  %1061 = vmatprep.subr.mxu0 0.0
  %1062 = vmatpush1.msra.mxu0 %v1036
  %1063 = vmatprep.subr.mxu0 0.0
  %1064 = vmatpush1.msra.mxu0 %v1037
  %1065 = vmatprep.subr.mxu0 0.0
  %1066 = vmatpush1.msra.mxu0 %v1038
  %1067 = vmatprep.subr.mxu0 0.0
  %1068 = vmatpush1.msra.mxu0 %v1039
  %1069 = vmatprep.subr.mxu0 0.0
  %1070 = vmatpush1.msra.mxu0 0.0
  %1071 = vmatprep.subr.mxu0 0.0
  %1072 = vmatpush1.msra.mxu0 0.0
  %1073 = vmatprep.subr.mxu0 0.0
  %1074 = vmatpush1.msra.mxu0 0.0
  %1075 = vmatprep.subr.mxu0 0.0
  %1076 = vmatpush1.msra.mxu0 0.0
  %1077 = vmatprep.subr.mxu0 0.0
  %1078 = vmatpush1.msra.mxu0 0.0
  %1079 = vmatprep.subr.mxu0 0.0
  %1080 = vmatpush1.msra.mxu0 0.0
  %1081 = vmatprep.subr.mxu0 0.0
  %1082 = vmatpush1.msra.mxu0 0.0
  %1083 = vmatprep.subr.mxu0 0.0
  %1084 = vmatpush1.msra.mxu0 0.0
  %1085 = vmatprep.subr.mxu0 0.0
  %1086 = vmatpush1.msra.mxu0 0.0
  %1087 = vmatprep.subr.mxu0 0.0
  %1088 = vmatpush1.msra.mxu0 0.0
  %1089 = vmatprep.subr.mxu0 0.0
  %1090 = vmatpush1.msra.mxu0 0.0
  %1091 = vmatprep.subr.mxu0 0.0
  %1092 = vmatpush1.msra.mxu0 0.0
  %1093 = vmatprep.subr.mxu0 0.0
  %1094 = vmatpush1.msra.mxu0 0.0
  %1095 = vmatprep.subr.mxu0 0.0
  %1096 = vmatpush1.msra.mxu0 0.0
  %1097 = vmatprep.subr.mxu0 0.0
  %1098 = vmatpush1.msra.mxu0 0.0
  %1099 = vmatprep.subr.mxu0 0.0
  %1100 = vmatpush1.msra.mxu0 0.0
  %1101 = vmatprep.subr.mxu0 0.0
  %1102 = vmatpush1.msra.mxu0 0.0
  %1103 = vmatprep.subr.mxu0 0.0
  %1104 = vmatpush1.msra.mxu0 0.0
  %1105 = vmatprep.subr.mxu0 0.0
  %1106 = vmatpush1.msra.mxu0 0.0
  %1107 = vmatprep.subr.mxu0 0.0
  %1108 = vmatpush1.msra.mxu0 0.0
  %1109 = vmatprep.subr.mxu0 0.0
  %1110 = vmatpush1.msra.mxu0 0.0
  %1111 = vmatprep.subr.mxu0 0.0
  %1112 = vmatpush1.msra.mxu0 0.0
  %1113 = vmatprep.subr.mxu0 0.0
  %1114 = vmatpush1.msra.mxu0 0.0
  %1115 = vmatprep.subr.mxu0 0.0
  %1116 = vmatpush1.msra.mxu0 0.0
  %1117 = vmatprep.mubr.f32.mxu0 0.0
  %1118 = vmatmul.mubr.f32.gmra.mrb[0].mxu0 %v1042
  %v1119 = vpop.f32.mrb[0].mxu0
  %v1120 = vadd.f32 0.0, %v1119
  %v1121 = vpop.f32.mrb[0].mxu0
  %1122 = vmatprep.mubr.f32.mxu0 0.0
  %1123 = vmatmul.mubr.f32.gmra.mrb[0].mxu0 %v1045
  %v1124 = vpop.f32.mrb[0].mxu0
  %v1125 = vadd.f32 0.0, %v1124
  %v1126 = vpop.f32.mrb[0].mxu0
  %1127 = vmatprep.mubr.f32.mxu0 0.0
  %1128 = vmatmul.mubr.f32.gmra.mrb[0].mxu0 %v1048
  %v1129 = vpop.f32.mrb[0].mxu0
  %v1130 = vadd.f32 0.0, %v1129
  %v1131 = vpop.f32.mrb[0].mxu0
  %1132 = vmatprep.mubr.f32.mxu0 0.0
  %1133 = vmatmul.mubr.f32.gmra.mrb[0].mxu0 %v1051
  %v1134 = vpop.f32.mrb[0].mxu0
  %v1135 = vadd.f32 0.0, %v1134
  %v1136 = vpop.f32.mrb[0].mxu0
  %1137 = vdwg.mxu0
  %v1138 = vsel %vm889, %v1120, 0.0
  %v1139 = vsel %vm889, %v1125, 0.0
  %v1140 = vadd.f32 %v1138, %v1139
  %v1141 = vsel %vm889, %v1130, 0.0
  %v1142 = vadd.f32 %v1140, %v1141
  %v1143 = vsel %vm889, %v1135, 0.0
  %v1144 = vadd.f32 %v1142, %v1143
  %v1145 = vrot.slane %v1144, 4
  %v1146 = vadd.f32 %v1144, %v1145
  %v1147 = vrot.slane %v1146, 2
  %v1148 = vadd.f32 %v1146, %v1147
  %v1149 = vrot.slane %v1148, 1
  %v1150 = vadd.f32 %v1148, %v1149
  %v1151 = vrcp.pop 32.0
  %v1152 = vmul.f32 %v1150, %v1151
  %v1153 = vsub.f32 %v1120, %v1152
  %v1154 = vsub.f32 %v1125, %v1152
  %v1155 = vsub.f32 %v1130, %v1152
  %v1156 = vsub.f32 %v1135, %v1152
  %v1157 = vmul.f32 %v1153, %v1153
  %v1158 = vmul.f32 %v1154, %v1154
  %v1159 = vmul.f32 %v1155, %v1155
  %v1160 = vmul.f32 %v1156, %v1156
  %v1161 = vsel %vm889, %v1157, 0.0
  %v1162 = vsel %vm889, %v1158, 0.0
  %v1163 = vadd.f32 %v1161, %v1162
  %v1164 = vsel %vm889, %v1159, 0.0
  %v1165 = vadd.f32 %v1163, %v1164
  %v1166 = vsel %vm889, %v1160, 0.0
  %v1167 = vadd.f32 %v1165, %v1166
  %v1168 = vrot.slane %v1167, 4
  %v1169 = vadd.f32 %v1167, %v1168
  %v1170 = vrot.slane %v1169, 2
  %v1171 = vadd.f32 %v1169, %v1170
  %v1172 = vrot.slane %v1171, 1
  %v1173 = vadd.f32 %v1171, %v1172
  %v1174 = vmul.f32 %v1173, %v1151
  %v1175 = vadd.f32 %v1174, 1e-05
  %v1176 = vrsqrt.pop %v1175
  %v1177 = vmul.f32 %v1153, %v1176
  %v1178 = vmul.f32 %v1154, %v1176
  %v1179 = vmul.f32 %v1155, %v1176
  %v1180 = vmul.f32 %v1156, %v1176
  %v1181 = vlaneseq
  %v1182 = vshrl.u32 %v1181, 7
  %v1183 = vsub.s32 1, %v1182
  %v1184 = vrot.slane %v760, %v1183
  %v1185 = vmul.f32 %v1177, %v1184
  %v1186 = vmul.f32 %v1178, %v1184
  %v1187 = vmul.f32 %v1179, %v1184
  %v1188 = vmul.f32 %v1180, %v1184
  %v1189 = vlaneseq
  %v1190 = vshrl.u32 %v1189, 7
  %v1191 = vsub.s32 2, %v1190
  %v1192 = vrot.slane %v760, %v1191
  %v1193 = vadd.f32 %v1185, %v1192
  %v1194 = vadd.f32 %v1186, %v1192
  %v1195 = vadd.f32 %v1187, %v1192
  %v1196 = vadd.f32 %v1188, %v1192
  %v1197 = vld [vmem:[%s7] sm:$0xff]
  %v1198 = vld [vmem:[%s7 + $0x8] sm:$0xff]
  %v1199 = vld [vmem:[%s7 + $0x10] sm:$0xff]
  %v1200 = vld [vmem:[%s7 + $0x18] sm:$0xff]
  %v1201 = vld [vmem:[%s7 + $0x20] sm:$0xff]
  %v1202 = vld [vmem:[%s7 + $0x28] sm:$0xff]
  %v1203 = vld [vmem:[%s8] sm:$0x7]
  %v1204 = vld [vmem:[%s9] sm:$0xff]
  %v1205 = vld [vmem:[%s9 + $0x8] sm:$0xff]
  %v1208 = vrot.slane %v1194, 7
  %v1209 = vrot.slane %v1196, 7
  %v1214 = vrot.slane %v1193, 7
  %v1215 = vsel %vm94, %v1214, %v1208
  %v1216 = vrot.slane %v1195, 7
  %v1217 = vsel %vm94, %v1216, %v1209
  %v1222 = vsel %vm94, %v1208, %v1214
  %v1223 = vsel %vm94, %v1209, %v1216
  %v1226 = vrot.slane %v1222, 1
  %v1227 = vrot.slane %v1215, 1
  %v1228 = vsel %vm143, %v1226, %v1227
  %v1229 = vsel %vm143, %v1227, %v1226
  %v1230 = vrot.slane %v1223, 1
  %v1231 = vrot.slane %v1217, 1
  %v1232 = vsel %vm143, %v1230, %v1231
  %v1233 = vsel %vm143, %v1231, %v1230
  %1234 = vrot.lane.b32.xlu0 %v1228, 16
  %v1235 = vpop.permute.xlu0 %1234
  %1236 = vrot.lane.b32.xlu0 %v1229, 16
  %v1237 = vpop.permute.xlu0 %1236
  %1238 = vrot.lane.b32.xlu0 %v1232, 16
  %v1239 = vpop.permute.xlu0 %1238
  %1240 = vrot.lane.b32.xlu0 %v1233, 16
  %v1241 = vpop.permute.xlu0 %1240
  %v1246 = vrot.slane %v1222, 2
  %v1247 = vrot.slane %v1215, 2
  %v1248 = vsel %vm224, %v1246, %v1247
  %v1249 = vsel %vm224, %v1247, %v1246
  %v1250 = vrot.slane %v1223, 2
  %v1251 = vrot.slane %v1217, 2
  %v1252 = vsel %vm224, %v1250, %v1251
  %v1253 = vsel %vm224, %v1251, %v1250
  %1254 = vrot.lane.b32.xlu0 %v1248, 32
  %v1255 = vpop.permute.xlu0 %1254
  %1256 = vrot.lane.b32.xlu0 %v1249, 32
  %v1257 = vpop.permute.xlu0 %1256
  %1258 = vrot.lane.b32.xlu0 %v1252, 32
  %v1259 = vpop.permute.xlu0 %1258
  %1260 = vrot.lane.b32.xlu0 %v1253, 32
  %v1261 = vpop.permute.xlu0 %1260
  %v1266 = vsel %vm889, %v1222, %v1235
  %v1267 = vsel %vm889, %v1215, %v1237
  %v1268 = vsel %vm889, %v1223, %v1239
  %v1269 = vsel %vm889, %v1217, %v1241
  %vm1270 = vcmask 261120
  %v1271 = vsel %vm1270, %v1266, %v1255
  %v1272 = vsel %vm1270, %v1267, %v1257
  %v1273 = vsel %vm1270, %v1268, %v1259
  %v1274 = vsel %vm1270, %v1269, %v1261
  %v1275 = vlaneseq
  %v1276 = vshrl.u32 %v1275, 7
  %v1277 = vsub.s32 0, %v1276
  %v1278 = vrot.slane %v1203, %v1277
  %vm1279 = vcmask 392192
  %v1281 = vsel %vm1279, %v1271, 0
  %v1284 = vsel %vm1279, %v1272, 0
  %v1287 = vsel %vm1279, %v1273, 0
  %v1290 = vsel %vm1279, %v1274, 0
  %1292 = vmatprep.subr.mxu0 0.0
  %1293 = vmatpush1.msra.mxu0 %v1197
  %1294 = vmatprep.subr.mxu0 0.0
  %1295 = vmatpush1.msra.mxu0 %v1198
  %1296 = vmatprep.subr.mxu0 0.0
  %1297 = vmatpush1.msra.mxu0 %v1199
  %1298 = vmatprep.subr.mxu0 0.0
  %1299 = vmatpush1.msra.mxu0 %v1200
  %1300 = vmatprep.subr.mxu0 0.0
  %1301 = vmatpush1.msra.mxu0 %v1201
  %1302 = vmatprep.subr.mxu0 0.0
  %1303 = vmatpush1.msra.mxu0 %v1202
  %1304 = vmatprep.subr.mxu0 0.0
  %1305 = vmatpush1.msra.mxu0 0.0
  %1306 = vmatprep.subr.mxu0 0.0
  %1307 = vmatpush1.msra.mxu0 0.0
  %1308 = vmatprep.subr.mxu0 0.0
  %1309 = vmatpush1.msra.mxu0 0.0
  %1310 = vmatprep.subr.mxu0 0.0
  %1311 = vmatpush1.msra.mxu0 0.0
  %1312 = vmatprep.subr.mxu0 0.0
  %1313 = vmatpush1.msra.mxu0 0.0
  %1314 = vmatprep.subr.mxu0 0.0
  %1315 = vmatpush1.msra.mxu0 0.0
  %1316 = vmatprep.subr.mxu0 0.0
  %1317 = vmatpush1.msra.mxu0 0.0
  %1318 = vmatprep.subr.mxu0 0.0
  %1319 = vmatpush1.msra.mxu0 0.0
  %1320 = vmatprep.subr.mxu0 0.0
  %1321 = vmatpush1.msra.mxu0 0.0
  %1322 = vmatprep.subr.mxu0 0.0
  %1323 = vmatpush1.msra.mxu0 0.0
  %1324 = vmatprep.subr.mxu0 0.0
  %1325 = vmatpush1.msra.mxu0 0.0
  %1326 = vmatprep.subr.mxu0 0.0
  %1327 = vmatpush1.msra.mxu0 0.0
  %1328 = vmatprep.subr.mxu0 0.0
  %1329 = vmatpush1.msra.mxu0 0.0
  %1330 = vmatprep.subr.mxu0 0.0
  %1331 = vmatpush1.msra.mxu0 0.0
  %1332 = vmatprep.subr.mxu0 0.0
  %1333 = vmatpush1.msra.mxu0 0.0
  %1334 = vmatprep.subr.mxu0 0.0
  %1335 = vmatpush1.msra.mxu0 0.0
  %1336 = vmatprep.subr.mxu0 0.0
  %1337 = vmatpush1.msra.mxu0 0.0
  %1338 = vmatprep.subr.mxu0 0.0
  %1339 = vmatpush1.msra.mxu0 0.0
  %1340 = vmatprep.subr.mxu0 0.0
  %1341 = vmatpush1.msra.mxu0 0.0
  %1342 = vmatprep.subr.mxu0 0.0
  %1343 = vmatpush1.msra.mxu0 0.0
  %1344 = vmatprep.subr.mxu0 0.0
  %1345 = vmatpush1.msra.mxu0 0.0
  %1346 = vmatprep.subr.mxu0 0.0
  %1347 = vmatpush1.msra.mxu0 0.0
  %1348 = vmatprep.subr.mxu0 0.0
  %1349 = vmatpush1.msra.mxu0 0.0
  %1350 = vmatprep.subr.mxu0 0.0
  %1351 = vmatpush1.msra.mxu0 0.0
  %1352 = vmatprep.subr.mxu0 0.0
  %1353 = vmatpush1.msra.mxu0 0.0
  %1354 = vmatprep.subr.mxu0 0.0
  %1355 = vmatpush1.msra.mxu0 0.0
  %1356 = vmatprep.mubr.f32.mxu0 0.0
  %1357 = vmatmul.mubr.f32.gmra.mrb[0].mxu0 %v1281
  %v1358 = vpop.f32.mrb[0].mxu0
  %v1359 = vadd.f32 %v1278, %v1358
  %v1360 = vpop.f32.mrb[0].mxu0
  %1361 = vmatprep.mubr.f32.mxu0 0.0
  %1362 = vmatmul.mubr.f32.gmra.mrb[0].mxu0 %v1284
  %v1363 = vpop.f32.mrb[0].mxu0
  %v1364 = vadd.f32 %v1278, %v1363
  %v1365 = vpop.f32.mrb[0].mxu0
  %1366 = vmatprep.mubr.f32.mxu0 0.0
  %1367 = vmatmul.mubr.f32.gmra.mrb[0].mxu0 %v1287
  %v1368 = vpop.f32.mrb[0].mxu0
  %v1369 = vadd.f32 %v1278, %v1368
  %v1370 = vpop.f32.mrb[0].mxu0
  %1371 = vmatprep.mubr.f32.mxu0 0.0
  %1372 = vmatmul.mubr.f32.gmra.mrb[0].mxu0 %v1290
  %v1373 = vpop.f32.mrb[0].mxu0
  %v1374 = vadd.f32 %v1278, %v1373
  %v1375 = vpop.f32.mrb[0].mxu0
  %1376 = vdwg.mxu0
  %v1377 = vmax.f32 %v1359, 0.0
  %v1378 = vmax.f32 %v1364, 0.0
  %v1379 = vmax.f32 %v1369, 0.0
  %v1380 = vmax.f32 %v1374, 0.0
  %v1382 = vsel %vm1270, %v1204, 0
  %v1385 = vsel %vm1270, %v1205, 0
  %1387 = vmatprep.subr.mxu0 0.0
  %1388 = vmatpush1.msra.mxu0 %v1377
  %1389 = vmatprep.subr.mxu0 0.0
  %1390 = vmatpush1.msra.mxu0 %v1378
  %1391 = vmatprep.subr.mxu0 0.0
  %1392 = vmatpush1.msra.mxu0 %v1379
  %1393 = vmatprep.subr.mxu0 0.0
  %1394 = vmatpush1.msra.mxu0 %v1380
  %1395 = vmatprep.subr.mxu0 0.0
  %1396 = vmatpush1.msra.mxu0 0.0
  %1397 = vmatprep.subr.mxu0 0.0
  %1398 = vmatpush1.msra.mxu0 0.0
  %1399 = vmatprep.subr.mxu0 0.0
  %1400 = vmatpush1.msra.mxu0 0.0
  %1401 = vmatprep.subr.mxu0 0.0
  %1402 = vmatpush1.msra.mxu0 0.0
  %1403 = vmatprep.subr.mxu0 0.0
  %1404 = vmatpush1.msra.mxu0 0.0
  %1405 = vmatprep.subr.mxu0 0.0
  %1406 = vmatpush1.msra.mxu0 0.0
  %1407 = vmatprep.subr.mxu0 0.0
  %1408 = vmatpush1.msra.mxu0 0.0
  %1409 = vmatprep.subr.mxu0 0.0
  %1410 = vmatpush1.msra.mxu0 0.0
  %1411 = vmatprep.subr.mxu0 0.0
  %1412 = vmatpush1.msra.mxu0 0.0
  %1413 = vmatprep.subr.mxu0 0.0
  %1414 = vmatpush1.msra.mxu0 0.0
  %1415 = vmatprep.subr.mxu0 0.0
  %1416 = vmatpush1.msra.mxu0 0.0
  %1417 = vmatprep.subr.mxu0 0.0
  %1418 = vmatpush1.msra.mxu0 0.0
  %1419 = vmatprep.subr.mxu0 0.0
  %1420 = vmatpush1.msra.mxu0 0.0
  %1421 = vmatprep.subr.mxu0 0.0
  %1422 = vmatpush1.msra.mxu0 0.0
  %1423 = vmatprep.subr.mxu0 0.0
  %1424 = vmatpush1.msra.mxu0 0.0
  %1425 = vmatprep.subr.mxu0 0.0
  %1426 = vmatpush1.msra.mxu0 0.0
  %1427 = vmatprep.subr.mxu0 0.0
  %1428 = vmatpush1.msra.mxu0 0.0
  %1429 = vmatprep.subr.mxu0 0.0
  %1430 = vmatpush1.msra.mxu0 0.0
  %1431 = vmatprep.subr.mxu0 0.0
  %1432 = vmatpush1.msra.mxu0 0.0
  %1433 = vmatprep.subr.mxu0 0.0
  %1434 = vmatpush1.msra.mxu0 0.0
  %1435 = vmatprep.subr.mxu0 0.0
  %1436 = vmatpush1.msra.mxu0 0.0
  %1437 = vmatprep.subr.mxu0 0.0
  %1438 = vmatpush1.msra.mxu0 0.0
  %1439 = vmatprep.subr.mxu0 0.0
  %1440 = vmatpush1.msra.mxu0 0.0
  %1441 = vmatprep.subr.mxu0 0.0
  %1442 = vmatpush1.msra.mxu0 0.0
  %1443 = vmatprep.subr.mxu0 0.0
  %1444 = vmatpush1.msra.mxu0 0.0
  %1445 = vmatprep.subr.mxu0 0.0
  %1446 = vmatpush1.msra.mxu0 0.0
  %1447 = vmatprep.subr.mxu0 0.0
  %1448 = vmatpush1.msra.mxu0 0.0
  %1449 = vmatprep.subr.mxu0 0.0
  %1450 = vmatpush1.msra.mxu0 0.0
  %1451 = vmatprep.mubr.f32.mxu0 0.0
  %1452 = vmatmul.mubr.f32.gmra.mrb[0].mxu0 %v1382
  %v1453 = vpop.f32.mrb[0].mxu0
  %v1454 = vadd.f32 0.0, %v1453
  %v1455 = vpop.f32.mrb[0].mxu0
  %1456 = vmatprep.mubr.f32.mxu0 0.0
  %1457 = vmatmul.mubr.f32.gmra.mrb[0].mxu0 %v1385
  %v1458 = vpop.f32.mrb[0].mxu0
  %v1459 = vadd.f32 0.0, %v1458
  %v1460 = vpop.f32.mrb[0].mxu0
  %1461 = vdwg.mxu0
  %v1462 = vsel %vm1270, %v1454, 0.0
  %v1463 = vsel %vm1270, %v1459, 0.0
  %v1464 = vadd.f32 %v1462, %v1463
  %v1465 = vrot.slane %v1464, 4
  %v1466 = vadd.f32 %v1464, %v1465
  %v1467 = vrot.slane %v1466, 2
  %v1468 = vadd.f32 %v1466, %v1467
  %v1469 = vrot.slane %v1468, 1
  %v1470 = vadd.f32 %v1468, %v1469
  %v1471 = vrcp.pop 16.0
  %v1472 = vmul.f32 %v1470, %v1471
  %v1473 = vsub.f32 %v1454, %v1472
  %v1474 = vsub.f32 %v1459, %v1472
  %v1475 = vmul.f32 %v1473, %v1473
  %v1476 = vmul.f32 %v1474, %v1474
  %v1477 = vsel %vm1270, %v1475, 0.0
  %v1478 = vsel %vm1270, %v1476, 0.0
  %v1479 = vadd.f32 %v1477, %v1478
  %v1480 = vrot.slane %v1479, 4
  %v1481 = vadd.f32 %v1479, %v1480
  %v1482 = vrot.slane %v1481, 2
  %v1483 = vadd.f32 %v1481, %v1482
  %v1484 = vrot.slane %v1483, 1
  %v1485 = vadd.f32 %v1483, %v1484
  %v1486 = vmul.f32 %v1485, %v1471
  %v1487 = vadd.f32 %v1486, 1e-05
  %v1488 = vrsqrt.pop %v1487
  %v1489 = vmul.f32 %v1473, %v1488
  %v1490 = vmul.f32 %v1474, %v1488
  %v1491 = vlaneseq
  %v1492 = vshrl.u32 %v1491, 7
  %v1493 = vsub.s32 1, %v1492
  %v1494 = vrot.slane %v1203, %v1493
  %v1495 = vmul.f32 %v1489, %v1494
  %v1496 = vmul.f32 %v1490, %v1494
  %v1497 = vlaneseq
  %v1498 = vshrl.u32 %v1497, 7
  %v1499 = vsub.s32 2, %v1498
  %v1500 = vrot.slane %v1203, %v1499
  %v1501 = vadd.f32 %v1495, %v1500
  %v1502 = vadd.f32 %v1496, %v1500
  %v1504 = vrot.slane %v1502, 7
  %v1506 = vsel %vm94, %v1501, %v1504
  %v1508 = vrot.slane %v1501, 1
  %v1510 = vsel %vm94, %v1508, %v1502
  %v1511 = vrot.slane %v1501, 2
  %v1513 = vrot.slane %v1502, 1
  %v1515 = vsel %vm94, %v1511, %v1513
  %v1516 = vrot.slane %v1501, 3
  %v1518 = vrot.slane %v1502, 2
  %v1520 = vsel %vm94, %v1516, %v1518
  %v1521 = vrot.slane %v1501, 4
  %v1523 = vrot.slane %v1502, 3
  %v1525 = vsel %vm94, %v1521, %v1523
  %v1526 = vrot.slane %v1501, 5
  %v1528 = vrot.slane %v1502, 4
  %v1530 = vsel %vm94, %v1526, %v1528
  %v1531 = vrot.slane %v1501, 6
  %v1533 = vrot.slane %v1502, 5
  %v1535 = vsel %vm94, %v1531, %v1533
  %v1536 = vrot.slane %v1501, 7
  %v1538 = vrot.slane %v1502, 6
  %v1540 = vsel %vm94, %v1536, %v1538
  %1542 = vrot.lane.b32.xlu0 %v1510, 32
  %v1543 = vpop.permute.xlu0 %1542
  %1546 = vrot.lane.b32.xlu0 %v1515, 64
  %v1547 = vpop.permute.xlu0 %1546
  %1550 = vrot.lane.b32.xlu0 %v1520, 96
  %v1551 = vpop.permute.xlu0 %1550
  %1554 = vrot.lane.b32.xlu0 %v1530, 32
  %v1555 = vpop.permute.xlu0 %1554
  %1558 = vrot.lane.b32.xlu0 %v1535, 64
  %v1559 = vpop.permute.xlu0 %1558
  %1562 = vrot.lane.b32.xlu0 %v1540, 96
  %v1563 = vpop.permute.xlu0 %1562
  %v1565 = vsel %vm1270, %v1506, %v1543
  %v1566 = vsel %vm1040, %v1565, %v1547
  %vm1567 = vcmask 785408
  %v1568 = vsel %vm1567, %v1566, %v1551
  %v1569 = vsel %vm1270, %v1525, %v1555
  %v1570 = vsel %vm1040, %v1569, %v1559
  %v1571 = vsel %vm1567, %v1570, %v1563
  %v1572 = vld [vmem:[%s13] sm:$0x77]
  %v1573 = vld [vmem:[%s10] sm:$0xff]
  %v1574 = vld [vmem:[%s10 + $0x8] sm:$0xff]
  %v1575 = vld [vmem:[%s10 + $0x10] sm:$0xff]
  %v1576 = vld [vmem:[%s10 + $0x18] sm:$0xff]
  %v1577 = vld [vmem:[%s10 + $0x20] sm:$0xff]
  %v1578 = vld [vmem:[%s10 + $0x28] sm:$0xff]
  %v1579 = vld [vmem:[%s10 + $0x30] sm:$0xff]
  %v1580 = vld [vmem:[%s10 + $0x38] sm:$0xff]
  %v1581 = vld [vmem:[%s10 + $0x40] sm:$0xff]
  %v1582 = vld [vmem:[%s10 + $0x48] sm:$0xff]
  %v1583 = vld [vmem:[%s10 + $0x50] sm:$0xff]
  %v1584 = vld [vmem:[%s10 + $0x58] sm:$0xff]
  %v1585 = vld [vmem:[%s10 + $0x60] sm:$0xff]
  %v1586 = vld [vmem:[%s10 + $0x68] sm:$0xff]
  %v1587 = vld [vmem:[%s10 + $0x70] sm:$0xff]
  %v1588 = vld [vmem:[%s10 + $0x78] sm:$0xff]
  %v1589 = vld [vmem:[%s10 + $0x80] sm:$0xff]
  %v1590 = vld [vmem:[%s10 + $0x88] sm:$0xff]
  %v1591 = vld [vmem:[%s10 + $0x90] sm:$0xff]
  %v1592 = vld [vmem:[%s10 + $0x98] sm:$0xff]
  %v1593 = vld [vmem:[%s10 + $0xa0] sm:$0xff]
  %v1594 = vld [vmem:[%s10 + $0xa8] sm:$0xff]
  %v1595 = vld [vmem:[%s10 + $0xb0] sm:$0xff]
  %v1596 = vld [vmem:[%s10 + $0xb8] sm:$0xff]
  %v1597 = vld [vmem:[%s10 + $0xc0] sm:$0xff]
  %v1598 = vld [vmem:[%s10 + $0xc8] sm:$0xff]
  %v1599 = vld [vmem:[%s10 + $0xd0] sm:$0xff]
  %v1600 = vld [vmem:[%s10 + $0xd8] sm:$0xff]
  %v1601 = vld [vmem:[%s10 + $0xe0] sm:$0xff]
  %v1602 = vld [vmem:[%s10 + $0xe8] sm:$0xff]
  %v1603 = vld [vmem:[%s10 + $0xf0] sm:$0xff]
  %v1604 = vld [vmem:[%s10 + $0xf8] sm:$0xff]
  %v1605 = vld [vmem:[%s10 + $0x100] sm:$0xff]
  %v1606 = vld [vmem:[%s10 + $0x108] sm:$0xff]
  %v1607 = vld [vmem:[%s10 + $0x110] sm:$0xff]
  %v1608 = vld [vmem:[%s10 + $0x118] sm:$0xff]
  %v1609 = vld [vmem:[%s10 + $0x120] sm:$0xff]
  %v1610 = vld [vmem:[%s10 + $0x128] sm:$0xff]
  %v1611 = vld [vmem:[%s10 + $0x130] sm:$0xff]
  %v1612 = vld [vmem:[%s10 + $0x138] sm:$0xff]
  %v1613 = vld [vmem:[%s10 + $0x140] sm:$0xff]
  %v1614 = vld [vmem:[%s10 + $0x148] sm:$0xff]
  %v1615 = vld [vmem:[%s10 + $0x150] sm:$0xff]
  %v1616 = vld [vmem:[%s10 + $0x158] sm:$0xff]
  %v1617 = vld [vmem:[%s10 + $0x160] sm:$0xff]
  %v1618 = vld [vmem:[%s10 + $0x168] sm:$0xff]
  %v1619 = vld [vmem:[%s10 + $0x170] sm:$0xff]
  %v1620 = vld [vmem:[%s10 + $0x178] sm:$0xff]
  %v1621 = vld [vmem:[%s10 + $0x180] sm:$0xff]
  %v1622 = vld [vmem:[%s10 + $0x188] sm:$0xff]
  %v1623 = vld [vmem:[%s10 + $0x190] sm:$0xff]
  %v1624 = vld [vmem:[%s10 + $0x198] sm:$0xff]
  %v1625 = vld [vmem:[%s10 + $0x1a0] sm:$0xff]
  %v1626 = vld [vmem:[%s10 + $0x1a8] sm:$0xff]
  %v1627 = vld [vmem:[%s10 + $0x1b0] sm:$0xff]
  %v1628 = vld [vmem:[%s10 + $0x1b8] sm:$0xff]
  %v1629 = vld [vmem:[%s10 + $0x1c0] sm:$0xff]
  %v1630 = vld [vmem:[%s10 + $0x1c8] sm:$0xff]
  %v1631 = vld [vmem:[%s10 + $0x1d0] sm:$0xff]
  %v1632 = vld [vmem:[%s10 + $0x1d8] sm:$0xff]
  %v1633 = vld [vmem:[%s10 + $0x1e0] sm:$0xff]
  %v1634 = vld [vmem:[%s10 + $0x1e8] sm:$0xff]
  %v1635 = vld [vmem:[%s10 + $0x1f0] sm:$0xff]
  %v1636 = vld [vmem:[%s10 + $0x1f8] sm:$0xff]
  %v1638 = vlaneseq
  %v1639 = vshrl.u32 %v1638, 7
  %v1640 = vsub.s32 0, %v1639
  %v1641 = vrot.slane %v1572, %v1640
  %v1642 = vlaneseq
  %v1643 = vshrl.u32 %v1642, 7
  %v1644 = vsub.s32 4, %v1643
  %v1645 = vrot.slane %v1572, %v1644
  %v1648 = vlaneseq
  %v1649 = vshrl.u32 %v1648, 7
  %v1650 = vsub.s32 0, %v1649
  %v1651 = vrot.slane %v1641, %v1650
  %v1652 = vlaneseq
  %v1653 = vshrl.u32 %v1652, 7
  %v1654 = vsub.s32 0, %v1653
  %v1655 = vrot.slane %v1645, %v1654
  %1656 = vmatprep.subr.mxu0 %v1574
  %1657 = vmatpush1.msra.mxu0 %v1573
  %1658 = vmatprep.subr.mxu0 %v1576
  %1659 = vmatpush1.msra.mxu0 %v1575
  %1660 = vmatprep.subr.mxu0 %v1578
  %1661 = vmatpush1.msra.mxu0 %v1577
  %1662 = vmatprep.subr.mxu0 %v1580
  %1663 = vmatpush1.msra.mxu0 %v1579
  %1664 = vmatprep.subr.mxu0 %v1582
  %1665 = vmatpush1.msra.mxu0 %v1581
  %1666 = vmatprep.subr.mxu0 %v1584
  %1667 = vmatpush1.msra.mxu0 %v1583
  %1668 = vmatprep.subr.mxu0 %v1586
  %1669 = vmatpush1.msra.mxu0 %v1585
  %1670 = vmatprep.subr.mxu0 %v1588
  %1671 = vmatpush1.msra.mxu0 %v1587
  %1672 = vmatprep.subr.mxu0 %v1590
  %1673 = vmatpush1.msra.mxu0 %v1589
  %1674 = vmatprep.subr.mxu0 %v1592
  %1675 = vmatpush1.msra.mxu0 %v1591
  %1676 = vmatprep.subr.mxu0 %v1594
  %1677 = vmatpush1.msra.mxu0 %v1593
  %1678 = vmatprep.subr.mxu0 %v1596
  %1679 = vmatpush1.msra.mxu0 %v1595
  %1680 = vmatprep.subr.mxu0 %v1598
  %1681 = vmatpush1.msra.mxu0 %v1597
  %1682 = vmatprep.subr.mxu0 %v1600
  %1683 = vmatpush1.msra.mxu0 %v1599
  %1684 = vmatprep.subr.mxu0 %v1602
  %1685 = vmatpush1.msra.mxu0 %v1601
  %1686 = vmatprep.subr.mxu0 %v1604
  %1687 = vmatpush1.msra.mxu0 %v1603
  %1688 = vmatprep.subr.mxu0 %v1606
  %1689 = vmatpush1.msra.mxu0 %v1605
  %1690 = vmatprep.subr.mxu0 %v1608
  %1691 = vmatpush1.msra.mxu0 %v1607
  %1692 = vmatprep.subr.mxu0 %v1610
  %1693 = vmatpush1.msra.mxu0 %v1609
  %1694 = vmatprep.subr.mxu0 %v1612
  %1695 = vmatpush1.msra.mxu0 %v1611
  %1696 = vmatprep.subr.mxu0 %v1614
  %1697 = vmatpush1.msra.mxu0 %v1613
  %1698 = vmatprep.subr.mxu0 %v1616
  %1699 = vmatpush1.msra.mxu0 %v1615
  %1700 = vmatprep.subr.mxu0 %v1618
  %1701 = vmatpush1.msra.mxu0 %v1617
  %1702 = vmatprep.subr.mxu0 %v1620
  %1703 = vmatpush1.msra.mxu0 %v1619
  %1704 = vmatprep.subr.mxu0 %v1622
  %1705 = vmatpush1.msra.mxu0 %v1621
  %1706 = vmatprep.subr.mxu0 %v1624
  %1707 = vmatpush1.msra.mxu0 %v1623
  %1708 = vmatprep.subr.mxu0 %v1626
  %1709 = vmatpush1.msra.mxu0 %v1625
  %1710 = vmatprep.subr.mxu0 %v1628
  %1711 = vmatpush1.msra.mxu0 %v1627
  %1712 = vmatprep.subr.mxu0 %v1630
  %1713 = vmatpush1.msra.mxu0 %v1629
  %1714 = vmatprep.subr.mxu0 %v1632
  %1715 = vmatpush1.msra.mxu0 %v1631
  %1716 = vmatprep.subr.mxu0 %v1634
  %1717 = vmatpush1.msra.mxu0 %v1633
  %1718 = vmatprep.subr.mxu0 %v1636
  %1719 = vmatpush1.msra.mxu0 %v1635
  %1720 = vmatprep.mubr.f32.mxu0 %v1571
  %1721 = vmatmul.mubr.f32.gmra.mrb[0].mxu0 %v1568
  %v1722 = vpop.f32.mrb[0].mxu0
  %v1723 = vadd.f32 %v1651, %v1722
  %v1724 = vpop.f32.mrb[0].mxu0
  %v1725 = vadd.f32 %v1655, %v1724
  %1726 = vdwg.mxu0
  %v1727 = vmax.f32 %v1723, 0.0
  %v1728 = vmax.f32 %v1725, 0.0
  %v1729 = vld [vmem:[%s11] sm:$0xff]
  %v1730 = vld [vmem:[%s11 + $0x8] sm:$0xff]
  %v1731 = vld [vmem:[%s11 + $0x10] sm:$0xff]
  %v1732 = vld [vmem:[%s11 + $0x18] sm:$0xff]
  %v1733 = vld [vmem:[%s11 + $0x20] sm:$0xff]
  %v1734 = vld [vmem:[%s11 + $0x28] sm:$0xff]
  %v1735 = vld [vmem:[%s11 + $0x30] sm:$0xff]
  %v1736 = vld [vmem:[%s11 + $0x38] sm:$0xff]
  %v1737 = vld [vmem:[%s11 + $0x40] sm:$0xff]
  %v1738 = vld [vmem:[%s11 + $0x48] sm:$0xff]
  %v1739 = vld [vmem:[%s11 + $0x50] sm:$0xff]
  %v1740 = vld [vmem:[%s11 + $0x58] sm:$0xff]
  %v1741 = vld [vmem:[%s11 + $0x60] sm:$0xff]
  %v1742 = vld [vmem:[%s11 + $0x68] sm:$0xff]
  %v1743 = vld [vmem:[%s11 + $0x70] sm:$0xff]
  %v1744 = vld [vmem:[%s11 + $0x78] sm:$0xff]
  %v1745 = vld [vmem:[%s11 + $0x80] sm:$0xff]
  %v1746 = vld [vmem:[%s11 + $0x88] sm:$0xff]
  %v1747 = vld [vmem:[%s11 + $0x90] sm:$0xff]
  %v1748 = vld [vmem:[%s11 + $0x98] sm:$0xff]
  %v1749 = vld [vmem:[%s11 + $0xa0] sm:$0xff]
  %v1750 = vld [vmem:[%s11 + $0xa8] sm:$0xff]
  %v1751 = vld [vmem:[%s11 + $0xb0] sm:$0xff]
  %v1752 = vld [vmem:[%s11 + $0xb8] sm:$0xff]
  %v1753 = vld [vmem:[%s11 + $0xc0] sm:$0xff]
  %v1754 = vlaneseq
  %v1755 = vshrl.u32 %v1754, 7
  %v1756 = vsub.s32 1, %v1755
  %v1757 = vrot.slane %v1572, %v1756
  %vm1758 = vcmask 588800
  %v1760 = vsel %vm1758, %v1728, 0
  %1762 = vmatprep.subr.mxu0 0.0
  %1763 = vmatpush1.msra.mxu0 %v1729
  %1764 = vmatprep.subr.mxu0 0.0
  %1765 = vmatpush1.msra.mxu0 %v1730
  %1766 = vmatprep.subr.mxu0 0.0
  %1767 = vmatpush1.msra.mxu0 %v1731
  %1768 = vmatprep.subr.mxu0 0.0
  %1769 = vmatpush1.msra.mxu0 %v1732
  %1770 = vmatprep.subr.mxu0 0.0
  %1771 = vmatpush1.msra.mxu0 %v1733
  %1772 = vmatprep.subr.mxu0 0.0
  %1773 = vmatpush1.msra.mxu0 %v1734
  %1774 = vmatprep.subr.mxu0 0.0
  %1775 = vmatpush1.msra.mxu0 %v1735
  %1776 = vmatprep.subr.mxu0 0.0
  %1777 = vmatpush1.msra.mxu0 %v1736
  %1778 = vmatprep.subr.mxu0 0.0
  %1779 = vmatpush1.msra.mxu0 %v1737
  %1780 = vmatprep.subr.mxu0 0.0
  %1781 = vmatpush1.msra.mxu0 %v1738
  %1782 = vmatprep.subr.mxu0 0.0
  %1783 = vmatpush1.msra.mxu0 %v1739
  %1784 = vmatprep.subr.mxu0 0.0
  %1785 = vmatpush1.msra.mxu0 %v1740
  %1786 = vmatprep.subr.mxu0 0.0
  %1787 = vmatpush1.msra.mxu0 %v1741
  %1788 = vmatprep.subr.mxu0 0.0
  %1789 = vmatpush1.msra.mxu0 %v1742
  %1790 = vmatprep.subr.mxu0 0.0
  %1791 = vmatpush1.msra.mxu0 %v1743
  %1792 = vmatprep.subr.mxu0 0.0
  %1793 = vmatpush1.msra.mxu0 %v1744
  %1794 = vmatprep.subr.mxu0 0.0
  %1795 = vmatpush1.msra.mxu0 %v1745
  %1796 = vmatprep.subr.mxu0 0.0
  %1797 = vmatpush1.msra.mxu0 %v1746
  %1798 = vmatprep.subr.mxu0 0.0
  %1799 = vmatpush1.msra.mxu0 %v1747
  %1800 = vmatprep.subr.mxu0 0.0
  %1801 = vmatpush1.msra.mxu0 %v1748
  %1802 = vmatprep.subr.mxu0 0.0
  %1803 = vmatpush1.msra.mxu0 %v1749
  %1804 = vmatprep.subr.mxu0 0.0
  %1805 = vmatpush1.msra.mxu0 %v1750
  %1806 = vmatprep.subr.mxu0 0.0
  %1807 = vmatpush1.msra.mxu0 %v1751
  %1808 = vmatprep.subr.mxu0 0.0
  %1809 = vmatpush1.msra.mxu0 %v1752
  %1810 = vmatprep.subr.mxu0 0.0
  %1811 = vmatpush1.msra.mxu0 %v1753
  %1812 = vmatprep.subr.mxu0 0.0
  %1813 = vmatpush1.msra.mxu0 0.0
  %1814 = vmatprep.subr.mxu0 0.0
  %1815 = vmatpush1.msra.mxu0 0.0
  %1816 = vmatprep.subr.mxu0 0.0
  %1817 = vmatpush1.msra.mxu0 0.0
  %1818 = vmatprep.subr.mxu0 0.0
  %1819 = vmatpush1.msra.mxu0 0.0
  %1820 = vmatprep.subr.mxu0 0.0
  %1821 = vmatpush1.msra.mxu0 0.0
  %1822 = vmatprep.subr.mxu0 0.0
  %1823 = vmatpush1.msra.mxu0 0.0
  %1824 = vmatprep.subr.mxu0 0.0
  %1825 = vmatpush1.msra.mxu0 0.0
  %1826 = vmatprep.mubr.f32.mxu0 %v1760
  %1827 = vmatmul.mubr.f32.gmra.mrb[0].mxu0 %v1727
  %v1828 = vpop.f32.mrb[0].mxu0
  %v1829 = vadd.f32 %v1757, %v1828
  %v1830 = vpop.f32.mrb[0].mxu0
  %1831 = vdwg.mxu0
  %v1832 = vmax.f32 %v1829, 0.0
  %v1833 = vld [vmem:[%s12] sm:$0xff]
  %v1834 = vld [vmem:[%s12 + $0x8] sm:$0xff]
  %v1835 = vld [vmem:[%s12 + $0x10] sm:$0xff]
  %v1836 = vld [vmem:[%s12 + $0x18] sm:$0xff]
  %v1837 = vld [vmem:[%s12 + $0x20] sm:$0xff]
  %v1838 = vld [vmem:[%s12 + $0x28] sm:$0xff]
  %v1839 = vld [vmem:[%s12 + $0x30] sm:$0xff]
  %v1840 = vld [vmem:[%s12 + $0x38] sm:$0xff]
  %v1841 = vld [vmem:[%s12 + $0x40] sm:$0xff]
  %v1842 = vld [vmem:[%s12 + $0x48] sm:$0xff]
  %v1843 = vld [vmem:[%s12 + $0x50] sm:$0xff]
  %v1844 = vld [vmem:[%s12 + $0x58] sm:$0xff]
  %v1845 = vld [vmem:[%s12 + $0x60] sm:$0xf]
  %v1846 = vlaneseq
  %v1847 = vshrl.u32 %v1846, 7
  %v1848 = vsub.s32 2, %v1847
  %v1849 = vrot.slane %v1572, %v1848
  %vm1850 = vcmask 818176
  %v1852 = vsel %vm1850, %v1832, 0
  %v1855 = vsel %vm392, %v1845, 0
  %1857 = vmatprep.subr.mxu0 0.0
  %1858 = vmatpush1.msra.mxu0 %v1833
  %1859 = vmatprep.subr.mxu0 0.0
  %1860 = vmatpush1.msra.mxu0 %v1834
  %1861 = vmatprep.subr.mxu0 0.0
  %1862 = vmatpush1.msra.mxu0 %v1835
  %1863 = vmatprep.subr.mxu0 0.0
  %1864 = vmatpush1.msra.mxu0 %v1836
  %1865 = vmatprep.subr.mxu0 0.0
  %1866 = vmatpush1.msra.mxu0 %v1837
  %1867 = vmatprep.subr.mxu0 0.0
  %1868 = vmatpush1.msra.mxu0 %v1838
  %1869 = vmatprep.subr.mxu0 0.0
  %1870 = vmatpush1.msra.mxu0 %v1839
  %1871 = vmatprep.subr.mxu0 0.0
  %1872 = vmatpush1.msra.mxu0 %v1840
  %1873 = vmatprep.subr.mxu0 0.0
  %1874 = vmatpush1.msra.mxu0 %v1841
  %1875 = vmatprep.subr.mxu0 0.0
  %1876 = vmatpush1.msra.mxu0 %v1842
  %1877 = vmatprep.subr.mxu0 0.0
  %1878 = vmatpush1.msra.mxu0 %v1843
  %1879 = vmatprep.subr.mxu0 0.0
  %1880 = vmatpush1.msra.mxu0 %v1844
  %1881 = vmatprep.subr.mxu0 0.0
  %1882 = vmatpush1.msra.mxu0 %v1855
  %1883 = vmatprep.subr.mxu0 0.0
  %1884 = vmatpush1.msra.mxu0 0.0
  %1885 = vmatprep.subr.mxu0 0.0
  %1886 = vmatpush1.msra.mxu0 0.0
  %1887 = vmatprep.subr.mxu0 0.0
  %1888 = vmatpush1.msra.mxu0 0.0
  %1889 = vmatprep.subr.mxu0 0.0
  %1890 = vmatpush1.msra.mxu0 0.0
  %1891 = vmatprep.subr.mxu0 0.0
  %1892 = vmatpush1.msra.mxu0 0.0
  %1893 = vmatprep.subr.mxu0 0.0
  %1894 = vmatpush1.msra.mxu0 0.0
  %1895 = vmatprep.subr.mxu0 0.0
  %1896 = vmatpush1.msra.mxu0 0.0
  %1897 = vmatprep.subr.mxu0 0.0
  %1898 = vmatpush1.msra.mxu0 0.0
  %1899 = vmatprep.subr.mxu0 0.0
  %1900 = vmatpush1.msra.mxu0 0.0
  %1901 = vmatprep.subr.mxu0 0.0
  %1902 = vmatpush1.msra.mxu0 0.0
  %1903 = vmatprep.subr.mxu0 0.0
  %1904 = vmatpush1.msra.mxu0 0.0
  %1905 = vmatprep.subr.mxu0 0.0
  %1906 = vmatpush1.msra.mxu0 0.0
  %1907 = vmatprep.subr.mxu0 0.0
  %1908 = vmatpush1.msra.mxu0 0.0
  %1909 = vmatprep.subr.mxu0 0.0
  %1910 = vmatpush1.msra.mxu0 0.0
  %1911 = vmatprep.subr.mxu0 0.0
  %1912 = vmatpush1.msra.mxu0 0.0
  %1913 = vmatprep.subr.mxu0 0.0
  %1914 = vmatpush1.msra.mxu0 0.0
  %1915 = vmatprep.subr.mxu0 0.0
  %1916 = vmatpush1.msra.mxu0 0.0
  %1917 = vmatprep.subr.mxu0 0.0
  %1918 = vmatpush1.msra.mxu0 0.0
  %1919 = vmatprep.subr.mxu0 0.0
  %1920 = vmatpush1.msra.mxu0 0.0
  %1921 = vmatprep.mubr.f32.mxu0 0.0
  %1922 = vmatmul.mubr.f32.gmra.mrb[0].mxu0 %v1852
  %v1923 = vpop.f32.mrb[0].mxu0
  %v1924 = vadd.f32 %v1849, %v1923
  %v1925 = vpop.f32.mrb[0].mxu0
  %1926 = vdwg.mxu0
  %vm1927 = vcmask 254976
  %1928 = vst.msk [vmem:[%s14] sm:$0x3] %vm1927, %v1924
  // Predicated region
  $region58: #{encode_forward.1} parent=0 // pred_check
    _
  $region59: #{encode_forward.1} parent=0 // pred_check_branch
    %1930 = sbr.rel (0) target = $region61
  $region60: #{encode_forward.1} parent=0 // pred_region
    _
  $region61: #{encode_forward.1} parent=0 // pred_fallthru
    _
  // Predicated region
  $region62: #{encode_forward.1} parent=0 // pred_check
    _
  $region63: #{encode_forward.1} parent=0 // pred_check_branch
    %1932 = sbr.rel (0) target = $region65
  $region64: #{encode_forward.1} parent=0 // pred_region
    _
  $region65: #{encode_forward.1} parent=0 // pred_fallthru
    _

</llo_original>
